<compile_context>
chip_gen: v7x
topology: tpu7x:2x2x1
jax: 0.10.0
libtpu: 0.0.40
codegen_flags: <defaults>
</compile_context>

<pallas_src>
import jax
import jax.numpy as jnp
from jax.experimental import pallas as pl
from jax.experimental.pallas import tpu as pltpu

# ---- synthetic toy_corewar config constants (deterministic, in-script) ----
N_INSTRUCTIONS = 5
N_VARS = 2
NUM_REGISTERS = 4
N_TARGETS = 4
NUM_ACTIONS = 10

INPUT_SIZE = N_INSTRUCTIONS + N_VARS * NUM_REGISTERS + 1   # 14
S_SIZE = N_TARGETS * 2                                     # 8

H_SIZE = 32
MIDDLE_SIZE = 32
LSTM_LAYERS = 2
SEQ_LEN = 8
BATCH = 2


def _round_up(n, m):
    return ((n + m - 1) // m) * m


def make_kernel(num_layers, seq_len, batch, h_size, s_size, in_pads, num_actions):
    """Build the Pallas kernel; layer count and all shapes are static."""

    def kernel(*refs):
        idx = 0
        p_ref = refs[idx]; idx += 1                       # (seq*batch, in_pads[0])
        s_ref = refs[idx]; idx += 1                       # (batch, s_size)
        w_slabs = list(refs[idx:idx + num_layers]); idx += num_layers
        b_lstm_ref = refs[idx]; idx += 1                  # (num_layers, 4h)  b_ih+b_hh
        ws_ref = refs[idx]; idx += 1                      # (2*s_size, s_size)
        bs_ref = refs[idx]; idx += 1                      # (2, s_size)
        w1_ref = refs[idx]; idx += 1                      # (h_size + s_size, middle)
        b1_ref = refs[idx]; idx += 1                      # (1, middle)
        wh_ref = refs[idx]; idx += 1                      # (middle, num_actions + 1)
        bh_ref = refs[idx]; idx += 1                      # (1, num_actions + 1)
        out_ref = refs[idx]; idx += 1                     # (batch, num_actions + 1)
        gx_ref = refs[idx]; idx += 1                      # scratch (seq*batch, 4h)
        hseq_ref = refs[idx]; idx += 1                    # scratch (seq*batch, h)

        # ---------------- LSTM (PyTorch gate order i, f, g, o) ----------------
        h_last = None
        for l in range(num_layers):
            in_l = in_pads[l]
            w_ih_t = w_slabs[l][0:in_l, :]                # (in_l, 4h)   (8-aligned split)
            w_hh_t = w_slabs[l][in_l:, :]                 # (h, 4h)
            bias = b_lstm_ref[l:l + 1, :]                 # (1, 4h), pre-summed

            # Hoisted input projection for ALL timesteps: one MXU push per layer,
            # bias folded in here (not re-added every step).
            x_all = p_ref[...] if l == 0 else hseq_ref[...]
            gx_ref[...] = (
                jnp.dot(x_all, w_ih_t, preferred_element_type=jnp.float32) + bias)

            write_hseq = (l < num_layers - 1)             # last layer: never read back

            def step(t, carry, _w_hh_t=w_hh_t, _write=write_hseq):
                h_prev, c_prev = carry
                gx = gx_ref[pl.ds(t * batch, batch), :]   # (batch, 4h), bias included
                gates = gx + jnp.dot(h_prev, _w_hh_t,
                                     preferred_element_type=jnp.float32)
                # one full-width sigmoid covers i/f/o lanes; tanh only on g slice
                sg = jax.nn.sigmoid(gates)
                i_g = sg[:, 0 * h_size:1 * h_size]
                f_g = sg[:, 1 * h_size:2 * h_size]
                o_g = sg[:, 3 * h_size:4 * h_size]
                g_g = jnp.tanh(gates[:, 2 * h_size:3 * h_size])
                c_t = f_g * c_prev + i_g * g_g
                h_t = o_g * jnp.tanh(c_t)
                if _write:
                    hseq_ref[pl.ds(t * batch, batch), :] = h_t
                return (h_t, c_t)

            h0 = jnp.zeros((batch, h_size), jnp.float32)
            c0 = jnp.zeros((batch, h_size), jnp.float32)
            h_last, _ = jax.lax.fori_loop(0, seq_len, step, (h0, c0), unroll=True)

        # ---------------- s branch: two Linear+ReLU (packed weight slab) ----------
        s_in = s_ref[...]
        s1 = jnp.maximum(
            jnp.dot(s_in, ws_ref[0:s_size, :],
                    preferred_element_type=jnp.float32) + bs_ref[0:1, :], 0.0)
        s2 = jnp.maximum(
            jnp.dot(s1, ws_ref[s_size:2 * s_size, :],
                    preferred_element_type=jnp.float32) + bs_ref[1:2, :], 0.0)

        # ---------------- fc1 over cat([h_last, s2]) via weight row-split ----------
        x = jnp.maximum(
            jnp.dot(h_last, w1_ref[0:h_size, :],
                    preferred_element_type=jnp.float32)
            + jnp.dot(s2, w1_ref[h_size:, :],
                      preferred_element_type=jnp.float32)
            + b1_ref[...], 0.0)

        # ---------------- fused actor+critic head: single matmul, merged output ----
        y = jnp.dot(x, wh_ref[...], preferred_element_type=jnp.float32) + bh_ref[...]
        lane = jax.lax.broadcasted_iota(jnp.int32, y.shape, 1)
        is_act = lane < num_actions
        m = jnp.max(jnp.where(is_act, y, -jnp.inf), axis=-1, keepdims=True)
        e = jnp.where(is_act, jnp.exp(y - m), 0.0)
        denom = jnp.sum(e, axis=-1, keepdims=True)
        # lanes [0, num_actions): softmax probs; lane num_actions: raw critic value
        out_ref[...] = jnp.where(is_act, e / denom, y)

    return kernel


def ac_model_forward(p, s, params):
    num_layers = len(params["lstm"])
    seq_len, batch, input_size = p.shape
    h_size = params["lstm"][0][1].shape[1]
    s_size = s.shape[1]
    num_actions = params["fc_actor_w"].shape[0]

    # pad layer-0 feature dim to a multiple of 8 so the weight-slab split is aligned
    in0_pad = _round_up(input_size, 8)
    in_pads = [in0_pad] + [h_size] * (num_layers - 1)

    p_flat = p.astype(jnp.float32).reshape(seq_len * batch, input_size)
    if in0_pad != input_size:
        p_flat = jnp.pad(p_flat, ((0, 0), (0, in0_pad - input_size)))

    flat_inputs = [p_flat, s.astype(jnp.float32)]
    bias_rows = []
    for l, (w_ih, w_hh, b_ih, b_hh) in enumerate(params["lstm"]):
        w_ih_t = w_ih.T                                   # (in, 4h)
        if l == 0 and in0_pad != input_size:
            w_ih_t = jnp.pad(w_ih_t, ((0, in0_pad - input_size), (0, 0)))
        flat_inputs.append(jnp.concatenate([w_ih_t, w_hh.T], axis=0))  # (in_pad+h, 4h)
        bias_rows.append((b_ih + b_hh).reshape(1, -1))
    flat_inputs.append(jnp.concatenate(bias_rows, axis=0))             # (layers, 4h)

    flat_inputs += [
        jnp.concatenate([params["fc_s1_w"].T, params["fc_s2_w"].T], axis=0),  # (2s, s)
        jnp.stack([params["fc_s1_b"], params["fc_s2_b"]], axis=0),            # (2, s)
        params["fc1_w"].T,                                                    # (h+s, mid)
        params["fc1_b"].reshape(1, -1),
        jnp.concatenate([params["fc_actor_w"], params["fc_critic_w"]], axis=0).T,
        jnp.concatenate([params["fc_actor_b"], params["fc_critic_b"]]).reshape(1, -1),
    ]

    kernel = make_kernel(num_layers, seq_len, batch, h_size, s_size, in_pads,
                         num_actions)

    vspec = pl.BlockSpec(memory_space=pltpu.MemorySpace.VMEM)
    merged = pl.pallas_call(
        kernel,
        out_shape=jax.ShapeDtypeStruct((batch, num_actions + 1), jnp.float32),
        in_specs=[vspec] * len(flat_inputs),
        out_specs=vspec,
        scratch_shapes=[
            pltpu.VMEM((seq_len * batch, 4 * h_size), jnp.float32),  # hoisted gates
            pltpu.VMEM((seq_len * batch, h_size), jnp.float32),      # layer handoff
        ],
    )(*flat_inputs)

    return merged[:, :num_actions], merged[:, num_actions:]


# ---------------- deterministic parameter init (PyTorch-style uniform) ----------------
def init_params(key, h_size, middle_size, lstm_layers):
    def uniform(k, shape, fan):
        bound = 1.0 / float(fan) ** 0.5
        return jax.random.uniform(k, shape, jnp.float32, -bound, bound)

    keys = iter(jax.random.split(key, 64))
    lstm = []
    for l in range(lstm_layers):
        in_sz = INPUT_SIZE if l == 0 else h_size
        lstm.append((
            uniform(next(keys), (4 * h_size, in_sz), h_size),
            uniform(next(keys), (4 * h_size, h_size), h_size),
            uniform(next(keys), (4 * h_size,), h_size),
            uniform(next(keys), (4 * h_size,), h_size),
        ))

    def linear(out_f, in_f):
        return (uniform(next(keys), (out_f, in_f), in_f),
                uniform(next(keys), (out_f,), in_f))

    params = {"lstm": lstm}
    params["fc_s1_w"], params["fc_s1_b"] = linear(S_SIZE, S_SIZE)
    params["fc_s2_w"], params["fc_s2_b"] = linear(S_SIZE, S_SIZE)
    params["fc1_w"], params["fc1_b"] = linear(middle_size, h_size + S_SIZE)
    params["fc_actor_w"], params["fc_actor_b"] = linear(NUM_ACTIONS, middle_size)
    params["fc_critic_w"], params["fc_critic_b"] = linear(1, middle_size)
    return params


# ---------------- pure-JAX reference (for correctness check) ----------------
def reference_forward(p, s, params):
    x_seq = p.astype(jnp.float32)
    h = None
    for (w_ih, w_hh, b_ih, b_hh) in params["lstm"]:
        h_size = w_hh.shape[1]
        h = jnp.zeros((p.shape[1], h_size), jnp.float32)
        c = jnp.zeros_like(h)
        outs = []
        for t in range(x_seq.shape[0]):
            gates = x_seq[t] @ w_ih.T + b_ih + h @ w_hh.T + b_hh
            i, f, g, o = jnp.split(gates, 4, axis=1)
            c = jax.nn.sigmoid(f) * c + jax.nn.sigmoid(i) * jnp.tanh(g)
            h = jax.nn.sigmoid(o) * jnp.tanh(c)
            outs.append(h)
        x_seq = jnp.stack(outs)
    h_last = h
    sv = s.astype(jnp.float32)
    sv = jax.nn.relu(sv @ params["fc_s1_w"].T + params["fc_s1_b"])
    sv = jax.nn.relu(sv @ params["fc_s2_w"].T + params["fc_s2_b"])
    x = jnp.concatenate([h_last, sv], axis=1)
    x = jax.nn.relu(x @ params["fc1_w"].T + params["fc1_b"])
    act = jax.nn.softmax(x @ params["fc_actor_w"].T + params["fc_actor_b"], axis=-1)
    val = x @ params["fc_critic_w"].T + params["fc_critic_b"]
    return act, val


if __name__ == "__main__":
    key = jax.random.PRNGKey(0)
    k_p, k_s, k_params = jax.random.split(key, 3)

    p = jax.random.normal(k_p, (SEQ_LEN, BATCH, INPUT_SIZE), jnp.float32)
    s = jax.random.normal(k_s, (BATCH, S_SIZE), jnp.float32)
    params = init_params(k_params, H_SIZE, MIDDLE_SIZE, LSTM_LAYERS)

    act, val = ac_model_forward(p, s, params)
    jax.block_until_ready((act, val))

    act_ref, val_ref = reference_forward(p, s, params)
    assert jnp.allclose(act, act_ref, atol=2e-4, rtol=2e-4), "actor mismatch"
    assert jnp.allclose(val, val_ref, atol=2e-4, rtol=2e-4), "critic mismatch"

    print("KERNEL_OK")
</pallas_src>

<mosaic_0001>
module attributes {stable_mosaic.version = 11 : i64} {
  func.func @kernel(%arg0: memref<16x16xf32, #tpu.memory_space<vmem>>, %arg1: memref<2x8xf32, #tpu.memory_space<vmem>>, %arg2: memref<48x128xf32, #tpu.memory_space<vmem>>, %arg3: memref<64x128xf32, #tpu.memory_space<vmem>>, %arg4: memref<2x128xf32, #tpu.memory_space<vmem>>, %arg5: memref<16x8xf32, #tpu.memory_space<vmem>>, %arg6: memref<2x8xf32, #tpu.memory_space<vmem>>, %arg7: memref<40x32xf32, #tpu.memory_space<vmem>>, %arg8: memref<1x32xf32, #tpu.memory_space<vmem>>, %arg9: memref<32x11xf32, #tpu.memory_space<vmem>>, %arg10: memref<1x11xf32, #tpu.memory_space<vmem>>, %arg11: memref<2x11xf32, #tpu.memory_space<vmem>>, %arg12: memref<16x128xf32, #tpu.memory_space<vmem>>, %arg13: memref<16x32xf32, #tpu.memory_space<vmem>>) attributes {dimension_semantics = [], scalar_prefetch = 0 : i64, scratch_operands = 2 : i64, tpu.core_type = #tpu.core_type<tc>} {
    %c0 = arith.constant 0 : index
    %c0_0 = arith.constant 0 : index
    %0 = vector.load %arg2[%c0, %c0_0] : memref<48x128xf32, #tpu.memory_space<vmem>>, vector<16x128xf32>
    %c16 = arith.constant 16 : index
    %c0_1 = arith.constant 0 : index
    %1 = vector.load %arg2[%c16, %c0_1] : memref<48x128xf32, #tpu.memory_space<vmem>>, vector<32x128xf32>
    %c0_2 = arith.constant 0 : index
    %c0_3 = arith.constant 0 : index
    %2 = vector.load %arg4[%c0_2, %c0_3] : memref<2x128xf32, #tpu.memory_space<vmem>>, vector<1x128xf32>
    %c0_4 = arith.constant 0 : index
    %c0_5 = arith.constant 0 : index
    %3 = vector.load %arg0[%c0_4, %c0_5] : memref<16x16xf32, #tpu.memory_space<vmem>>, vector<16x16xf32>
    %cst = arith.constant dense<0.000000e+00> : vector<16x128xf32>
    %4 = tpu.matmul %3, %0, %cst {dimension_numbers = #tpu.dot_dimension_numbers<[1], [0], [0], [1], [0, 0, 1, 1], [], []>} : vector<16x16xf32>, vector<16x128xf32>, vector<16x128xf32> -> vector<16x128xf32>
    %5 = vector.broadcast %2 : vector<1x128xf32> to vector<16x128xf32>
    %6 = arith.addf %4, %5 : vector<16x128xf32>
    %c0_6 = arith.constant 0 : index
    %c0_7 = arith.constant 0 : index
    %7 = vector.load %arg12[%c0_6, %c0_7] : memref<16x128xf32, #tpu.memory_space<vmem>>, vector<16x128xf32>
    tpu.vector_store %arg12[%c0_6, %c0_7], %6 {strides = array<i32>} : memref<16x128xf32, #tpu.memory_space<vmem>>, vector<16x128xf32>,
    %cst_8 = arith.constant 0.000000e+00 : f32
    %8 = vector.broadcast %cst_8 : f32 to vector<2x32xf32>
    %cst_9 = arith.constant 0.000000e+00 : f32
    %9 = vector.broadcast %cst_9 : f32 to vector<2x32xf32>
    %c0_i32 = arith.constant 0 : i32
    %c2_i32 = arith.constant 2 : i32
    %10 = arith.muli %c0_i32, %c2_i32 : i32
    %11 = arith.index_cast %10 : i32 to index
    %c0_10 = arith.constant 0 : index
    %12 = vector.load %arg12[%11, %c0_10] : memref<16x128xf32, #tpu.memory_space<vmem>>, vector<2x128xf32>
    %cst_11 = arith.constant dense<0.000000e+00> : vector<2x128xf32>
    %13 = tpu.matmul %8, %1, %cst_11 {dimension_numbers = #tpu.dot_dimension_numbers<[1], [0], [0], [1], [0, 0, 1, 1], [], []>} : vector<2x32xf32>, vector<32x128xf32>, vector<2x128xf32> -> vector<2x128xf32>
    %14 = arith.addf %12, %13 : vector<2x128xf32>
    %15 = arith.negf %14 : vector<2x128xf32>
    %16 = math.exp %15 : vector<2x128xf32>
    %cst_12 = arith.constant 1.000000e+00 : f32
    %17 = vector.broadcast %cst_12 : f32 to vector<2x128xf32>
    %18 = arith.addf %17, %16 : vector<2x128xf32>
    %19 = arith.divf %17, %18 : vector<2x128xf32>
    %20 = vector.extract_strided_slice %19 {offsets = [0, 0], sizes = [2, 32], strides = [1, 1]} : vector<2x128xf32> to vector<2x32xf32>
    %21 = vector.extract_strided_slice %19 {offsets = [0, 32], sizes = [2, 32], strides = [1, 1]} : vector<2x128xf32> to vector<2x32xf32>
    %22 = vector.extract_strided_slice %19 {offsets = [0, 96], sizes = [2, 32], strides = [1, 1]} : vector<2x128xf32> to vector<2x32xf32>
    %23 = vector.extract_strided_slice %14 {offsets = [0, 64], sizes = [2, 32], strides = [1, 1]} : vector<2x128xf32> to vector<2x32xf32>
    %24 = math.tanh %23 : vector<2x32xf32>
    %25 = arith.mulf %21, %9 : vector<2x32xf32>
    %26 = arith.mulf %20, %24 : vector<2x32xf32>
    %27 = arith.addf %25, %26 : vector<2x32xf32>
    %28 = math.tanh %27 : vector<2x32xf32>
    %29 = arith.mulf %22, %28 : vector<2x32xf32>
    %c2_i32_13 = arith.constant 2 : i32
    %30 = arith.muli %c0_i32, %c2_i32_13 : i32
    %31 = arith.index_cast %30 : i32 to index
    %c0_14 = arith.constant 0 : index
    %32 = vector.load %arg13[%31, %c0_14] : memref<16x32xf32, #tpu.memory_space<vmem>>, vector<2x32xf32>
    tpu.vector_store %arg13[%31, %c0_14], %29 {strides = array<i32>} : memref<16x32xf32, #tpu.memory_space<vmem>>, vector<2x32xf32>,
    %c1_i32 = arith.constant 1 : i32
    %c2_i32_15 = arith.constant 2 : i32
    %33 = arith.muli %c1_i32, %c2_i32_15 : i32
    %34 = arith.index_cast %33 : i32 to index
    %c0_16 = arith.constant 0 : index
    %35 = vector.load %arg12[%34, %c0_16] : memref<16x128xf32, #tpu.memory_space<vmem>>, vector<2x128xf32>
    %cst_17 = arith.constant dense<0.000000e+00> : vector<2x128xf32>
    %36 = tpu.matmul %29, %1, %cst_17 {dimension_numbers = #tpu.dot_dimension_numbers<[1], [0], [0], [1], [0, 0, 1, 1], [], []>} : vector<2x32xf32>, vector<32x128xf32>, vector<2x128xf32> -> vector<2x128xf32>
    %37 = arith.addf %35, %36 : vector<2x128xf32>
    %38 = arith.negf %37 : vector<2x128xf32>
    %39 = math.exp %38 : vector<2x128xf32>
    %cst_18 = arith.constant 1.000000e+00 : f32
    %40 = vector.broadcast %cst_18 : f32 to vector<2x128xf32>
    %41 = arith.addf %40, %39 : vector<2x128xf32>
    %42 = arith.divf %40, %41 : vector<2x128xf32>
    %43 = vector.extract_strided_slice %42 {offsets = [0, 0], sizes = [2, 32], strides = [1, 1]} : vector<2x128xf32> to vector<2x32xf32>
    %44 = vector.extract_strided_slice %42 {offsets = [0, 32], sizes = [2, 32], strides = [1, 1]} : vector<2x128xf32> to vector<2x32xf32>
    %45 = vector.extract_strided_slice %42 {offsets = [0, 96], sizes = [2, 32], strides = [1, 1]} : vector<2x128xf32> to vector<2x32xf32>
    %46 = vector.extract_strided_slice %37 {offsets = [0, 64], sizes = [2, 32], strides = [1, 1]} : vector<2x128xf32> to vector<2x32xf32>
    %47 = math.tanh %46 : vector<2x32xf32>
    %48 = arith.mulf %44, %27 : vector<2x32xf32>
    %49 = arith.mulf %43, %47 : vector<2x32xf32>
    %50 = arith.addf %48, %49 : vector<2x32xf32>
    %51 = math.tanh %50 : vector<2x32xf32>
    %52 = arith.mulf %45, %51 : vector<2x32xf32>
    %c2_i32_19 = arith.constant 2 : i32
    %53 = arith.muli %c1_i32, %c2_i32_19 : i32
    %54 = arith.index_cast %53 : i32 to index
    %c0_20 = arith.constant 0 : index
    %55 = vector.load %arg13[%54, %c0_20] : memref<16x32xf32, #tpu.memory_space<vmem>>, vector<2x32xf32>
    tpu.vector_store %arg13[%54, %c0_20], %52 {strides = array<i32>} : memref<16x32xf32, #tpu.memory_space<vmem>>, vector<2x32xf32>,
    %c2_i32_21 = arith.constant 2 : i32
    %c2_i32_22 = arith.constant 2 : i32
    %56 = arith.muli %c2_i32_21, %c2_i32_22 : i32
    %57 = arith.index_cast %56 : i32 to index
    %c0_23 = arith.constant 0 : index
    %58 = vector.load %arg12[%57, %c0_23] : memref<16x128xf32, #tpu.memory_space<vmem>>, vector<2x128xf32>
    %cst_24 = arith.constant dense<0.000000e+00> : vector<2x128xf32>
    %59 = tpu.matmul %52, %1, %cst_24 {dimension_numbers = #tpu.dot_dimension_numbers<[1], [0], [0], [1], [0, 0, 1, 1], [], []>} : vector<2x32xf32>, vector<32x128xf32>, vector<2x128xf32> -> vector<2x128xf32>
    %60 = arith.addf %58, %59 : vector<2x128xf32>
    %61 = arith.negf %60 : vector<2x128xf32>
    %62 = math.exp %61 : vector<2x128xf32>
    %cst_25 = arith.constant 1.000000e+00 : f32
    %63 = vector.broadcast %cst_25 : f32 to vector<2x128xf32>
    %64 = arith.addf %63, %62 : vector<2x128xf32>
    %65 = arith.divf %63, %64 : vector<2x128xf32>
    %66 = vector.extract_strided_slice %65 {offsets = [0, 0], sizes = [2, 32], strides = [1, 1]} : vector<2x128xf32> to vector<2x32xf32>
    %67 = vector.extract_strided_slice %65 {offsets = [0, 32], sizes = [2, 32], strides = [1, 1]} : vector<2x128xf32> to vector<2x32xf32>
    %68 = vector.extract_strided_slice %65 {offsets = [0, 96], sizes = [2, 32], strides = [1, 1]} : vector<2x128xf32> to vector<2x32xf32>
    %69 = vector.extract_strided_slice %60 {offsets = [0, 64], sizes = [2, 32], strides = [1, 1]} : vector<2x128xf32> to vector<2x32xf32>
    %70 = math.tanh %69 : vector<2x32xf32>
    %71 = arith.mulf %67, %50 : vector<2x32xf32>
    %72 = arith.mulf %66, %70 : vector<2x32xf32>
    %73 = arith.addf %71, %72 : vector<2x32xf32>
    %74 = math.tanh %73 : vector<2x32xf32>
    %75 = arith.mulf %68, %74 : vector<2x32xf32>
    %c2_i32_26 = arith.constant 2 : i32
    %76 = arith.muli %c2_i32_21, %c2_i32_26 : i32
    %77 = arith.index_cast %76 : i32 to index
    %c0_27 = arith.constant 0 : index
    %78 = vector.load %arg13[%77, %c0_27] : memref<16x32xf32, #tpu.memory_space<vmem>>, vector<2x32xf32>
    tpu.vector_store %arg13[%77, %c0_27], %75 {strides = array<i32>} : memref<16x32xf32, #tpu.memory_space<vmem>>, vector<2x32xf32>,
    %c3_i32 = arith.constant 3 : i32
    %c2_i32_28 = arith.constant 2 : i32
    %79 = arith.muli %c3_i32, %c2_i32_28 : i32
    %80 = arith.index_cast %79 : i32 to index
    %c0_29 = arith.constant 0 : index
    %81 = vector.load %arg12[%80, %c0_29] : memref<16x128xf32, #tpu.memory_space<vmem>>, vector<2x128xf32>
    %cst_30 = arith.constant dense<0.000000e+00> : vector<2x128xf32>
    %82 = tpu.matmul %75, %1, %cst_30 {dimension_numbers = #tpu.dot_dimension_numbers<[1], [0], [0], [1], [0, 0, 1, 1], [], []>} : vector<2x32xf32>, vector<32x128xf32>, vector<2x128xf32> -> vector<2x128xf32>
    %83 = arith.addf %81, %82 : vector<2x128xf32>
    %84 = arith.negf %83 : vector<2x128xf32>
    %85 = math.exp %84 : vector<2x128xf32>
    %cst_31 = arith.constant 1.000000e+00 : f32
    %86 = vector.broadcast %cst_31 : f32 to vector<2x128xf32>
    %87 = arith.addf %86, %85 : vector<2x128xf32>
    %88 = arith.divf %86, %87 : vector<2x128xf32>
    %89 = vector.extract_strided_slice %88 {offsets = [0, 0], sizes = [2, 32], strides = [1, 1]} : vector<2x128xf32> to vector<2x32xf32>
    %90 = vector.extract_strided_slice %88 {offsets = [0, 32], sizes = [2, 32], strides = [1, 1]} : vector<2x128xf32> to vector<2x32xf32>
    %91 = vector.extract_strided_slice %88 {offsets = [0, 96], sizes = [2, 32], strides = [1, 1]} : vector<2x128xf32> to vector<2x32xf32>
    %92 = vector.extract_strided_slice %83 {offsets = [0, 64], sizes = [2, 32], strides = [1, 1]} : vector<2x128xf32> to vector<2x32xf32>
    %93 = math.tanh %92 : vector<2x32xf32>
    %94 = arith.mulf %90, %73 : vector<2x32xf32>
    %95 = arith.mulf %89, %93 : vector<2x32xf32>
    %96 = arith.addf %94, %95 : vector<2x32xf32>
    %97 = math.tanh %96 : vector<2x32xf32>
    %98 = arith.mulf %91, %97 : vector<2x32xf32>
    %c2_i32_32 = arith.constant 2 : i32
    %99 = arith.muli %c3_i32, %c2_i32_32 : i32
    %100 = arith.index_cast %99 : i32 to index
    %c0_33 = arith.constant 0 : index
    %101 = vector.load %arg13[%100, %c0_33] : memref<16x32xf32, #tpu.memory_space<vmem>>, vector<2x32xf32>
    tpu.vector_store %arg13[%100, %c0_33], %98 {strides = array<i32>} : memref<16x32xf32, #tpu.memory_space<vmem>>, vector<2x32xf32>,
    %c4_i32 = arith.constant 4 : i32
    %c2_i32_34 = arith.constant 2 : i32
    %102 = arith.muli %c4_i32, %c2_i32_34 : i32
    %103 = arith.index_cast %102 : i32 to index
    %c0_35 = arith.constant 0 : index
    %104 = vector.load %arg12[%103, %c0_35] : memref<16x128xf32, #tpu.memory_space<vmem>>, vector<2x128xf32>
    %cst_36 = arith.constant dense<0.000000e+00> : vector<2x128xf32>
    %105 = tpu.matmul %98, %1, %cst_36 {dimension_numbers = #tpu.dot_dimension_numbers<[1], [0], [0], [1], [0, 0, 1, 1], [], []>} : vector<2x32xf32>, vector<32x128xf32>, vector<2x128xf32> -> vector<2x128xf32>
    %106 = arith.addf %104, %105 : vector<2x128xf32>
    %107 = arith.negf %106 : vector<2x128xf32>
    %108 = math.exp %107 : vector<2x128xf32>
    %cst_37 = arith.constant 1.000000e+00 : f32
    %109 = vector.broadcast %cst_37 : f32 to vector<2x128xf32>
    %110 = arith.addf %109, %108 : vector<2x128xf32>
    %111 = arith.divf %109, %110 : vector<2x128xf32>
    %112 = vector.extract_strided_slice %111 {offsets = [0, 0], sizes = [2, 32], strides = [1, 1]} : vector<2x128xf32> to vector<2x32xf32>
    %113 = vector.extract_strided_slice %111 {offsets = [0, 32], sizes = [2, 32], strides = [1, 1]} : vector<2x128xf32> to vector<2x32xf32>
    %114 = vector.extract_strided_slice %111 {offsets = [0, 96], sizes = [2, 32], strides = [1, 1]} : vector<2x128xf32> to vector<2x32xf32>
    %115 = vector.extract_strided_slice %106 {offsets = [0, 64], sizes = [2, 32], strides = [1, 1]} : vector<2x128xf32> to vector<2x32xf32>
    %116 = math.tanh %115 : vector<2x32xf32>
    %117 = arith.mulf %113, %96 : vector<2x32xf32>
    %118 = arith.mulf %112, %116 : vector<2x32xf32>
    %119 = arith.addf %117, %118 : vector<2x32xf32>
    %120 = math.tanh %119 : vector<2x32xf32>
    %121 = arith.mulf %114, %120 : vector<2x32xf32>
    %c2_i32_38 = arith.constant 2 : i32
    %122 = arith.muli %c4_i32, %c2_i32_38 : i32
    %123 = arith.index_cast %122 : i32 to index
    %c0_39 = arith.constant 0 : index
    %124 = vector.load %arg13[%123, %c0_39] : memref<16x32xf32, #tpu.memory_space<vmem>>, vector<2x32xf32>
    tpu.vector_store %arg13[%123, %c0_39], %121 {strides = array<i32>} : memref<16x32xf32, #tpu.memory_space<vmem>>, vector<2x32xf32>,
    %c5_i32 = arith.constant 5 : i32
    %c2_i32_40 = arith.constant 2 : i32
    %125 = arith.muli %c5_i32, %c2_i32_40 : i32
    %126 = arith.index_cast %125 : i32 to index
    %c0_41 = arith.constant 0 : index
    %127 = vector.load %arg12[%126, %c0_41] : memref<16x128xf32, #tpu.memory_space<vmem>>, vector<2x128xf32>
    %cst_42 = arith.constant dense<0.000000e+00> : vector<2x128xf32>
    %128 = tpu.matmul %121, %1, %cst_42 {dimension_numbers = #tpu.dot_dimension_numbers<[1], [0], [0], [1], [0, 0, 1, 1], [], []>} : vector<2x32xf32>, vector<32x128xf32>, vector<2x128xf32> -> vector<2x128xf32>
    %129 = arith.addf %127, %128 : vector<2x128xf32>
    %130 = arith.negf %129 : vector<2x128xf32>
    %131 = math.exp %130 : vector<2x128xf32>
    %cst_43 = arith.constant 1.000000e+00 : f32
    %132 = vector.broadcast %cst_43 : f32 to vector<2x128xf32>
    %133 = arith.addf %132, %131 : vector<2x128xf32>
    %134 = arith.divf %132, %133 : vector<2x128xf32>
    %135 = vector.extract_strided_slice %134 {offsets = [0, 0], sizes = [2, 32], strides = [1, 1]} : vector<2x128xf32> to vector<2x32xf32>
    %136 = vector.extract_strided_slice %134 {offsets = [0, 32], sizes = [2, 32], strides = [1, 1]} : vector<2x128xf32> to vector<2x32xf32>
    %137 = vector.extract_strided_slice %134 {offsets = [0, 96], sizes = [2, 32], strides = [1, 1]} : vector<2x128xf32> to vector<2x32xf32>
    %138 = vector.extract_strided_slice %129 {offsets = [0, 64], sizes = [2, 32], strides = [1, 1]} : vector<2x128xf32> to vector<2x32xf32>
    %139 = math.tanh %138 : vector<2x32xf32>
    %140 = arith.mulf %136, %119 : vector<2x32xf32>
    %141 = arith.mulf %135, %139 : vector<2x32xf32>
    %142 = arith.addf %140, %141 : vector<2x32xf32>
    %143 = math.tanh %142 : vector<2x32xf32>
    %144 = arith.mulf %137, %143 : vector<2x32xf32>
    %c2_i32_44 = arith.constant 2 : i32
    %145 = arith.muli %c5_i32, %c2_i32_44 : i32
    %146 = arith.index_cast %145 : i32 to index
    %c0_45 = arith.constant 0 : index
    %147 = vector.load %arg13[%146, %c0_45] : memref<16x32xf32, #tpu.memory_space<vmem>>, vector<2x32xf32>
    tpu.vector_store %arg13[%146, %c0_45], %144 {strides = array<i32>} : memref<16x32xf32, #tpu.memory_space<vmem>>, vector<2x32xf32>,
    %c6_i32 = arith.constant 6 : i32
    %c2_i32_46 = arith.constant 2 : i32
    %148 = arith.muli %c6_i32, %c2_i32_46 : i32
    %149 = arith.index_cast %148 : i32 to index
    %c0_47 = arith.constant 0 : index
    %150 = vector.load %arg12[%149, %c0_47] : memref<16x128xf32, #tpu.memory_space<vmem>>, vector<2x128xf32>
    %cst_48 = arith.constant dense<0.000000e+00> : vector<2x128xf32>
    %151 = tpu.matmul %144, %1, %cst_48 {dimension_numbers = #tpu.dot_dimension_numbers<[1], [0], [0], [1], [0, 0, 1, 1], [], []>} : vector<2x32xf32>, vector<32x128xf32>, vector<2x128xf32> -> vector<2x128xf32>
    %152 = arith.addf %150, %151 : vector<2x128xf32>
    %153 = arith.negf %152 : vector<2x128xf32>
    %154 = math.exp %153 : vector<2x128xf32>
    %cst_49 = arith.constant 1.000000e+00 : f32
    %155 = vector.broadcast %cst_49 : f32 to vector<2x128xf32>
    %156 = arith.addf %155, %154 : vector<2x128xf32>
    %157 = arith.divf %155, %156 : vector<2x128xf32>
    %158 = vector.extract_strided_slice %157 {offsets = [0, 0], sizes = [2, 32], strides = [1, 1]} : vector<2x128xf32> to vector<2x32xf32>
    %159 = vector.extract_strided_slice %157 {offsets = [0, 32], sizes = [2, 32], strides = [1, 1]} : vector<2x128xf32> to vector<2x32xf32>
    %160 = vector.extract_strided_slice %157 {offsets = [0, 96], sizes = [2, 32], strides = [1, 1]} : vector<2x128xf32> to vector<2x32xf32>
    %161 = vector.extract_strided_slice %152 {offsets = [0, 64], sizes = [2, 32], strides = [1, 1]} : vector<2x128xf32> to vector<2x32xf32>
    %162 = math.tanh %161 : vector<2x32xf32>
    %163 = arith.mulf %159, %142 : vector<2x32xf32>
    %164 = arith.mulf %158, %162 : vector<2x32xf32>
    %165 = arith.addf %163, %164 : vector<2x32xf32>
    %166 = math.tanh %165 : vector<2x32xf32>
    %167 = arith.mulf %160, %166 : vector<2x32xf32>
    %c2_i32_50 = arith.constant 2 : i32
    %168 = arith.muli %c6_i32, %c2_i32_50 : i32
    %169 = arith.index_cast %168 : i32 to index
    %c0_51 = arith.constant 0 : index
    %170 = vector.load %arg13[%169, %c0_51] : memref<16x32xf32, #tpu.memory_space<vmem>>, vector<2x32xf32>
    tpu.vector_store %arg13[%169, %c0_51], %167 {strides = array<i32>} : memref<16x32xf32, #tpu.memory_space<vmem>>, vector<2x32xf32>,
    %c7_i32 = arith.constant 7 : i32
    %c2_i32_52 = arith.constant 2 : i32
    %171 = arith.muli %c7_i32, %c2_i32_52 : i32
    %172 = arith.index_cast %171 : i32 to index
    %c0_53 = arith.constant 0 : index
    %173 = vector.load %arg12[%172, %c0_53] : memref<16x128xf32, #tpu.memory_space<vmem>>, vector<2x128xf32>
    %cst_54 = arith.constant dense<0.000000e+00> : vector<2x128xf32>
    %174 = tpu.matmul %167, %1, %cst_54 {dimension_numbers = #tpu.dot_dimension_numbers<[1], [0], [0], [1], [0, 0, 1, 1], [], []>} : vector<2x32xf32>, vector<32x128xf32>, vector<2x128xf32> -> vector<2x128xf32>
    %175 = arith.addf %173, %174 : vector<2x128xf32>
    %176 = arith.negf %175 : vector<2x128xf32>
    %177 = math.exp %176 : vector<2x128xf32>
    %cst_55 = arith.constant 1.000000e+00 : f32
    %178 = vector.broadcast %cst_55 : f32 to vector<2x128xf32>
    %179 = arith.addf %178, %177 : vector<2x128xf32>
    %180 = arith.divf %178, %179 : vector<2x128xf32>
    %181 = vector.extract_strided_slice %180 {offsets = [0, 0], sizes = [2, 32], strides = [1, 1]} : vector<2x128xf32> to vector<2x32xf32>
    %182 = vector.extract_strided_slice %180 {offsets = [0, 32], sizes = [2, 32], strides = [1, 1]} : vector<2x128xf32> to vector<2x32xf32>
    %183 = vector.extract_strided_slice %180 {offsets = [0, 96], sizes = [2, 32], strides = [1, 1]} : vector<2x128xf32> to vector<2x32xf32>
    %184 = vector.extract_strided_slice %175 {offsets = [0, 64], sizes = [2, 32], strides = [1, 1]} : vector<2x128xf32> to vector<2x32xf32>
    %185 = math.tanh %184 : vector<2x32xf32>
    %186 = arith.mulf %182, %165 : vector<2x32xf32>
    %187 = arith.mulf %181, %185 : vector<2x32xf32>
    %188 = arith.addf %186, %187 : vector<2x32xf32>
    %189 = math.tanh %188 : vector<2x32xf32>
    %190 = arith.mulf %183, %189 : vector<2x32xf32>
    %c2_i32_56 = arith.constant 2 : i32
    %191 = arith.muli %c7_i32, %c2_i32_56 : i32
    %192 = arith.index_cast %191 : i32 to index
    %c0_57 = arith.constant 0 : index
    %193 = vector.load %arg13[%192, %c0_57] : memref<16x32xf32, #tpu.memory_space<vmem>>, vector<2x32xf32>
    tpu.vector_store %arg13[%192, %c0_57], %190 {strides = array<i32>} : memref<16x32xf32, #tpu.memory_space<vmem>>, vector<2x32xf32>,
    %c8_i32 = arith.constant 8 : i32
    %c0_58 = arith.constant 0 : index
    %c0_59 = arith.constant 0 : index
    %194 = vector.load %arg3[%c0_58, %c0_59] : memref<64x128xf32, #tpu.memory_space<vmem>>, vector<32x128xf32>
    %c32 = arith.constant 32 : index
    %c0_60 = arith.constant 0 : index
    %195 = vector.load %arg3[%c32, %c0_60] : memref<64x128xf32, #tpu.memory_space<vmem>>, vector<32x128xf32>
    %c1 = arith.constant 1 : index
    %c0_61 = arith.constant 0 : index
    %196 = vector.load %arg4[%c1, %c0_61] : memref<2x128xf32, #tpu.memory_space<vmem>>, vector<1x128xf32>
    %c0_62 = arith.constant 0 : index
    %c0_63 = arith.constant 0 : index
    %197 = vector.load %arg13[%c0_62, %c0_63] : memref<16x32xf32, #tpu.memory_space<vmem>>, vector<16x32xf32>
    %cst_64 = arith.constant dense<0.000000e+00> : vector<16x128xf32>
    %198 = tpu.matmul %197, %194, %cst_64 {dimension_numbers = #tpu.dot_dimension_numbers<[1], [0], [0], [1], [0, 0, 1, 1], [], []>} : vector<16x32xf32>, vector<32x128xf32>, vector<16x128xf32> -> vector<16x128xf32>
    %199 = vector.broadcast %196 : vector<1x128xf32> to vector<16x128xf32>
    %200 = arith.addf %198, %199 : vector<16x128xf32>
    %c0_65 = arith.constant 0 : index
    %c0_66 = arith.constant 0 : index
    %201 = vector.load %arg12[%c0_65, %c0_66] : memref<16x128xf32, #tpu.memory_space<vmem>>, vector<16x128xf32>
    tpu.vector_store %arg12[%c0_65, %c0_66], %200 {strides = array<i32>} : memref<16x128xf32, #tpu.memory_space<vmem>>, vector<16x128xf32>,
    %cst_67 = arith.constant 0.000000e+00 : f32
    %202 = vector.broadcast %cst_67 : f32 to vector<2x32xf32>
    %cst_68 = arith.constant 0.000000e+00 : f32
    %203 = vector.broadcast %cst_68 : f32 to vector<2x32xf32>
    %c0_i32_69 = arith.constant 0 : i32
    %c2_i32_70 = arith.constant 2 : i32
    %204 = arith.muli %c0_i32_69, %c2_i32_70 : i32
    %205 = arith.index_cast %204 : i32 to index
    %c0_71 = arith.constant 0 : index
    %206 = vector.load %arg12[%205, %c0_71] : memref<16x128xf32, #tpu.memory_space<vmem>>, vector<2x128xf32>
    %cst_72 = arith.constant dense<0.000000e+00> : vector<2x128xf32>
    %207 = tpu.matmul %202, %195, %cst_72 {dimension_numbers = #tpu.dot_dimension_numbers<[1], [0], [0], [1], [0, 0, 1, 1], [], []>} : vector<2x32xf32>, vector<32x128xf32>, vector<2x128xf32> -> vector<2x128xf32>
    %208 = arith.addf %206, %207 : vector<2x128xf32>
    %209 = arith.negf %208 : vector<2x128xf32>
    %210 = math.exp %209 : vector<2x128xf32>
    %cst_73 = arith.constant 1.000000e+00 : f32
    %211 = vector.broadcast %cst_73 : f32 to vector<2x128xf32>
    %212 = arith.addf %211, %210 : vector<2x128xf32>
    %213 = arith.divf %211, %212 : vector<2x128xf32>
    %214 = vector.extract_strided_slice %213 {offsets = [0, 0], sizes = [2, 32], strides = [1, 1]} : vector<2x128xf32> to vector<2x32xf32>
    %215 = vector.extract_strided_slice %213 {offsets = [0, 32], sizes = [2, 32], strides = [1, 1]} : vector<2x128xf32> to vector<2x32xf32>
    %216 = vector.extract_strided_slice %213 {offsets = [0, 96], sizes = [2, 32], strides = [1, 1]} : vector<2x128xf32> to vector<2x32xf32>
    %217 = vector.extract_strided_slice %208 {offsets = [0, 64], sizes = [2, 32], strides = [1, 1]} : vector<2x128xf32> to vector<2x32xf32>
    %218 = math.tanh %217 : vector<2x32xf32>
    %219 = arith.mulf %215, %203 : vector<2x32xf32>
    %220 = arith.mulf %214, %218 : vector<2x32xf32>
    %221 = arith.addf %219, %220 : vector<2x32xf32>
    %222 = math.tanh %221 : vector<2x32xf32>
    %223 = arith.mulf %216, %222 : vector<2x32xf32>
    %c1_i32_74 = arith.constant 1 : i32
    %c2_i32_75 = arith.constant 2 : i32
    %224 = arith.muli %c1_i32_74, %c2_i32_75 : i32
    %225 = arith.index_cast %224 : i32 to index
    %c0_76 = arith.constant 0 : index
    %226 = vector.load %arg12[%225, %c0_76] : memref<16x128xf32, #tpu.memory_space<vmem>>, vector<2x128xf32>
    %cst_77 = arith.constant dense<0.000000e+00> : vector<2x128xf32>
    %227 = tpu.matmul %223, %195, %cst_77 {dimension_numbers = #tpu.dot_dimension_numbers<[1], [0], [0], [1], [0, 0, 1, 1], [], []>} : vector<2x32xf32>, vector<32x128xf32>, vector<2x128xf32> -> vector<2x128xf32>
    %228 = arith.addf %226, %227 : vector<2x128xf32>
    %229 = arith.negf %228 : vector<2x128xf32>
    %230 = math.exp %229 : vector<2x128xf32>
    %cst_78 = arith.constant 1.000000e+00 : f32
    %231 = vector.broadcast %cst_78 : f32 to vector<2x128xf32>
    %232 = arith.addf %231, %230 : vector<2x128xf32>
    %233 = arith.divf %231, %232 : vector<2x128xf32>
    %234 = vector.extract_strided_slice %233 {offsets = [0, 0], sizes = [2, 32], strides = [1, 1]} : vector<2x128xf32> to vector<2x32xf32>
    %235 = vector.extract_strided_slice %233 {offsets = [0, 32], sizes = [2, 32], strides = [1, 1]} : vector<2x128xf32> to vector<2x32xf32>
    %236 = vector.extract_strided_slice %233 {offsets = [0, 96], sizes = [2, 32], strides = [1, 1]} : vector<2x128xf32> to vector<2x32xf32>
    %237 = vector.extract_strided_slice %228 {offsets = [0, 64], sizes = [2, 32], strides = [1, 1]} : vector<2x128xf32> to vector<2x32xf32>
    %238 = math.tanh %237 : vector<2x32xf32>
    %239 = arith.mulf %235, %221 : vector<2x32xf32>
    %240 = arith.mulf %234, %238 : vector<2x32xf32>
    %241 = arith.addf %239, %240 : vector<2x32xf32>
    %242 = math.tanh %241 : vector<2x32xf32>
    %243 = arith.mulf %236, %242 : vector<2x32xf32>
    %c2_i32_79 = arith.constant 2 : i32
    %c2_i32_80 = arith.constant 2 : i32
    %244 = arith.muli %c2_i32_79, %c2_i32_80 : i32
    %245 = arith.index_cast %244 : i32 to index
    %c0_81 = arith.constant 0 : index
    %246 = vector.load %arg12[%245, %c0_81] : memref<16x128xf32, #tpu.memory_space<vmem>>, vector<2x128xf32>
    %cst_82 = arith.constant dense<0.000000e+00> : vector<2x128xf32>
    %247 = tpu.matmul %243, %195, %cst_82 {dimension_numbers = #tpu.dot_dimension_numbers<[1], [0], [0], [1], [0, 0, 1, 1], [], []>} : vector<2x32xf32>, vector<32x128xf32>, vector<2x128xf32> -> vector<2x128xf32>
    %248 = arith.addf %246, %247 : vector<2x128xf32>
    %249 = arith.negf %248 : vector<2x128xf32>
    %250 = math.exp %249 : vector<2x128xf32>
    %cst_83 = arith.constant 1.000000e+00 : f32
    %251 = vector.broadcast %cst_83 : f32 to vector<2x128xf32>
    %252 = arith.addf %251, %250 : vector<2x128xf32>
    %253 = arith.divf %251, %252 : vector<2x128xf32>
    %254 = vector.extract_strided_slice %253 {offsets = [0, 0], sizes = [2, 32], strides = [1, 1]} : vector<2x128xf32> to vector<2x32xf32>
    %255 = vector.extract_strided_slice %253 {offsets = [0, 32], sizes = [2, 32], strides = [1, 1]} : vector<2x128xf32> to vector<2x32xf32>
    %256 = vector.extract_strided_slice %253 {offsets = [0, 96], sizes = [2, 32], strides = [1, 1]} : vector<2x128xf32> to vector<2x32xf32>
    %257 = vector.extract_strided_slice %248 {offsets = [0, 64], sizes = [2, 32], strides = [1, 1]} : vector<2x128xf32> to vector<2x32xf32>
    %258 = math.tanh %257 : vector<2x32xf32>
    %259 = arith.mulf %255, %241 : vector<2x32xf32>
    %260 = arith.mulf %254, %258 : vector<2x32xf32>
    %261 = arith.addf %259, %260 : vector<2x32xf32>
    %262 = math.tanh %261 : vector<2x32xf32>
    %263 = arith.mulf %256, %262 : vector<2x32xf32>
    %c3_i32_84 = arith.constant 3 : i32
    %c2_i32_85 = arith.constant 2 : i32
    %264 = arith.muli %c3_i32_84, %c2_i32_85 : i32
    %265 = arith.index_cast %264 : i32 to index
    %c0_86 = arith.constant 0 : index
    %266 = vector.load %arg12[%265, %c0_86] : memref<16x128xf32, #tpu.memory_space<vmem>>, vector<2x128xf32>
    %cst_87 = arith.constant dense<0.000000e+00> : vector<2x128xf32>
    %267 = tpu.matmul %263, %195, %cst_87 {dimension_numbers = #tpu.dot_dimension_numbers<[1], [0], [0], [1], [0, 0, 1, 1], [], []>} : vector<2x32xf32>, vector<32x128xf32>, vector<2x128xf32> -> vector<2x128xf32>
    %268 = arith.addf %266, %267 : vector<2x128xf32>
    %269 = arith.negf %268 : vector<2x128xf32>
    %270 = math.exp %269 : vector<2x128xf32>
    %cst_88 = arith.constant 1.000000e+00 : f32
    %271 = vector.broadcast %cst_88 : f32 to vector<2x128xf32>
    %272 = arith.addf %271, %270 : vector<2x128xf32>
    %273 = arith.divf %271, %272 : vector<2x128xf32>
    %274 = vector.extract_strided_slice %273 {offsets = [0, 0], sizes = [2, 32], strides = [1, 1]} : vector<2x128xf32> to vector<2x32xf32>
    %275 = vector.extract_strided_slice %273 {offsets = [0, 32], sizes = [2, 32], strides = [1, 1]} : vector<2x128xf32> to vector<2x32xf32>
    %276 = vector.extract_strided_slice %273 {offsets = [0, 96], sizes = [2, 32], strides = [1, 1]} : vector<2x128xf32> to vector<2x32xf32>
    %277 = vector.extract_strided_slice %268 {offsets = [0, 64], sizes = [2, 32], strides = [1, 1]} : vector<2x128xf32> to vector<2x32xf32>
    %278 = math.tanh %277 : vector<2x32xf32>
    %279 = arith.mulf %275, %261 : vector<2x32xf32>
    %280 = arith.mulf %274, %278 : vector<2x32xf32>
    %281 = arith.addf %279, %280 : vector<2x32xf32>
    %282 = math.tanh %281 : vector<2x32xf32>
    %283 = arith.mulf %276, %282 : vector<2x32xf32>
    %c4_i32_89 = arith.constant 4 : i32
    %c2_i32_90 = arith.constant 2 : i32
    %284 = arith.muli %c4_i32_89, %c2_i32_90 : i32
    %285 = arith.index_cast %284 : i32 to index
    %c0_91 = arith.constant 0 : index
    %286 = vector.load %arg12[%285, %c0_91] : memref<16x128xf32, #tpu.memory_space<vmem>>, vector<2x128xf32>
    %cst_92 = arith.constant dense<0.000000e+00> : vector<2x128xf32>
    %287 = tpu.matmul %283, %195, %cst_92 {dimension_numbers = #tpu.dot_dimension_numbers<[1], [0], [0], [1], [0, 0, 1, 1], [], []>} : vector<2x32xf32>, vector<32x128xf32>, vector<2x128xf32> -> vector<2x128xf32>
    %288 = arith.addf %286, %287 : vector<2x128xf32>
    %289 = arith.negf %288 : vector<2x128xf32>
    %290 = math.exp %289 : vector<2x128xf32>
    %cst_93 = arith.constant 1.000000e+00 : f32
    %291 = vector.broadcast %cst_93 : f32 to vector<2x128xf32>
    %292 = arith.addf %291, %290 : vector<2x128xf32>
    %293 = arith.divf %291, %292 : vector<2x128xf32>
    %294 = vector.extract_strided_slice %293 {offsets = [0, 0], sizes = [2, 32], strides = [1, 1]} : vector<2x128xf32> to vector<2x32xf32>
    %295 = vector.extract_strided_slice %293 {offsets = [0, 32], sizes = [2, 32], strides = [1, 1]} : vector<2x128xf32> to vector<2x32xf32>
    %296 = vector.extract_strided_slice %293 {offsets = [0, 96], sizes = [2, 32], strides = [1, 1]} : vector<2x128xf32> to vector<2x32xf32>
    %297 = vector.extract_strided_slice %288 {offsets = [0, 64], sizes = [2, 32], strides = [1, 1]} : vector<2x128xf32> to vector<2x32xf32>
    %298 = math.tanh %297 : vector<2x32xf32>
    %299 = arith.mulf %295, %281 : vector<2x32xf32>
    %300 = arith.mulf %294, %298 : vector<2x32xf32>
    %301 = arith.addf %299, %300 : vector<2x32xf32>
    %302 = math.tanh %301 : vector<2x32xf32>
    %303 = arith.mulf %296, %302 : vector<2x32xf32>
    %c5_i32_94 = arith.constant 5 : i32
    %c2_i32_95 = arith.constant 2 : i32
    %304 = arith.muli %c5_i32_94, %c2_i32_95 : i32
    %305 = arith.index_cast %304 : i32 to index
    %c0_96 = arith.constant 0 : index
    %306 = vector.load %arg12[%305, %c0_96] : memref<16x128xf32, #tpu.memory_space<vmem>>, vector<2x128xf32>
    %cst_97 = arith.constant dense<0.000000e+00> : vector<2x128xf32>
    %307 = tpu.matmul %303, %195, %cst_97 {dimension_numbers = #tpu.dot_dimension_numbers<[1], [0], [0], [1], [0, 0, 1, 1], [], []>} : vector<2x32xf32>, vector<32x128xf32>, vector<2x128xf32> -> vector<2x128xf32>
    %308 = arith.addf %306, %307 : vector<2x128xf32>
    %309 = arith.negf %308 : vector<2x128xf32>
    %310 = math.exp %309 : vector<2x128xf32>
    %cst_98 = arith.constant 1.000000e+00 : f32
    %311 = vector.broadcast %cst_98 : f32 to vector<2x128xf32>
    %312 = arith.addf %311, %310 : vector<2x128xf32>
    %313 = arith.divf %311, %312 : vector<2x128xf32>
    %314 = vector.extract_strided_slice %313 {offsets = [0, 0], sizes = [2, 32], strides = [1, 1]} : vector<2x128xf32> to vector<2x32xf32>
    %315 = vector.extract_strided_slice %313 {offsets = [0, 32], sizes = [2, 32], strides = [1, 1]} : vector<2x128xf32> to vector<2x32xf32>
    %316 = vector.extract_strided_slice %313 {offsets = [0, 96], sizes = [2, 32], strides = [1, 1]} : vector<2x128xf32> to vector<2x32xf32>
    %317 = vector.extract_strided_slice %308 {offsets = [0, 64], sizes = [2, 32], strides = [1, 1]} : vector<2x128xf32> to vector<2x32xf32>
    %318 = math.tanh %317 : vector<2x32xf32>
    %319 = arith.mulf %315, %301 : vector<2x32xf32>
    %320 = arith.mulf %314, %318 : vector<2x32xf32>
    %321 = arith.addf %319, %320 : vector<2x32xf32>
    %322 = math.tanh %321 : vector<2x32xf32>
    %323 = arith.mulf %316, %322 : vector<2x32xf32>
    %c6_i32_99 = arith.constant 6 : i32
    %c2_i32_100 = arith.constant 2 : i32
    %324 = arith.muli %c6_i32_99, %c2_i32_100 : i32
    %325 = arith.index_cast %324 : i32 to index
    %c0_101 = arith.constant 0 : index
    %326 = vector.load %arg12[%325, %c0_101] : memref<16x128xf32, #tpu.memory_space<vmem>>, vector<2x128xf32>
    %cst_102 = arith.constant dense<0.000000e+00> : vector<2x128xf32>
    %327 = tpu.matmul %323, %195, %cst_102 {dimension_numbers = #tpu.dot_dimension_numbers<[1], [0], [0], [1], [0, 0, 1, 1], [], []>} : vector<2x32xf32>, vector<32x128xf32>, vector<2x128xf32> -> vector<2x128xf32>
    %328 = arith.addf %326, %327 : vector<2x128xf32>
    %329 = arith.negf %328 : vector<2x128xf32>
    %330 = math.exp %329 : vector<2x128xf32>
    %cst_103 = arith.constant 1.000000e+00 : f32
    %331 = vector.broadcast %cst_103 : f32 to vector<2x128xf32>
    %332 = arith.addf %331, %330 : vector<2x128xf32>
    %333 = arith.divf %331, %332 : vector<2x128xf32>
    %334 = vector.extract_strided_slice %333 {offsets = [0, 0], sizes = [2, 32], strides = [1, 1]} : vector<2x128xf32> to vector<2x32xf32>
    %335 = vector.extract_strided_slice %333 {offsets = [0, 32], sizes = [2, 32], strides = [1, 1]} : vector<2x128xf32> to vector<2x32xf32>
    %336 = vector.extract_strided_slice %333 {offsets = [0, 96], sizes = [2, 32], strides = [1, 1]} : vector<2x128xf32> to vector<2x32xf32>
    %337 = vector.extract_strided_slice %328 {offsets = [0, 64], sizes = [2, 32], strides = [1, 1]} : vector<2x128xf32> to vector<2x32xf32>
    %338 = math.tanh %337 : vector<2x32xf32>
    %339 = arith.mulf %335, %321 : vector<2x32xf32>
    %340 = arith.mulf %334, %338 : vector<2x32xf32>
    %341 = arith.addf %339, %340 : vector<2x32xf32>
    %342 = math.tanh %341 : vector<2x32xf32>
    %343 = arith.mulf %336, %342 : vector<2x32xf32>
    %c7_i32_104 = arith.constant 7 : i32
    %c2_i32_105 = arith.constant 2 : i32
    %344 = arith.muli %c7_i32_104, %c2_i32_105 : i32
    %345 = arith.index_cast %344 : i32 to index
    %c0_106 = arith.constant 0 : index
    %346 = vector.load %arg12[%345, %c0_106] : memref<16x128xf32, #tpu.memory_space<vmem>>, vector<2x128xf32>
    %cst_107 = arith.constant dense<0.000000e+00> : vector<2x128xf32>
    %347 = tpu.matmul %343, %195, %cst_107 {dimension_numbers = #tpu.dot_dimension_numbers<[1], [0], [0], [1], [0, 0, 1, 1], [], []>} : vector<2x32xf32>, vector<32x128xf32>, vector<2x128xf32> -> vector<2x128xf32>
    %348 = arith.addf %346, %347 : vector<2x128xf32>
    %349 = arith.negf %348 : vector<2x128xf32>
    %350 = math.exp %349 : vector<2x128xf32>
    %cst_108 = arith.constant 1.000000e+00 : f32
    %351 = vector.broadcast %cst_108 : f32 to vector<2x128xf32>
    %352 = arith.addf %351, %350 : vector<2x128xf32>
    %353 = arith.divf %351, %352 : vector<2x128xf32>
    %354 = vector.extract_strided_slice %353 {offsets = [0, 0], sizes = [2, 32], strides = [1, 1]} : vector<2x128xf32> to vector<2x32xf32>
    %355 = vector.extract_strided_slice %353 {offsets = [0, 32], sizes = [2, 32], strides = [1, 1]} : vector<2x128xf32> to vector<2x32xf32>
    %356 = vector.extract_strided_slice %353 {offsets = [0, 96], sizes = [2, 32], strides = [1, 1]} : vector<2x128xf32> to vector<2x32xf32>
    %357 = vector.extract_strided_slice %348 {offsets = [0, 64], sizes = [2, 32], strides = [1, 1]} : vector<2x128xf32> to vector<2x32xf32>
    %358 = math.tanh %357 : vector<2x32xf32>
    %359 = arith.mulf %355, %341 : vector<2x32xf32>
    %360 = arith.mulf %354, %358 : vector<2x32xf32>
    %361 = arith.addf %359, %360 : vector<2x32xf32>
    %362 = math.tanh %361 : vector<2x32xf32>
    %363 = arith.mulf %356, %362 : vector<2x32xf32>
    %c8_i32_109 = arith.constant 8 : i32
    %c0_110 = arith.constant 0 : index
    %c0_111 = arith.constant 0 : index
    %364 = vector.load %arg1[%c0_110, %c0_111] : memref<2x8xf32, #tpu.memory_space<vmem>>, vector<2x8xf32>
    %c0_112 = arith.constant 0 : index
    %c0_113 = arith.constant 0 : index
    %365 = vector.load %arg5[%c0_112, %c0_113] : memref<16x8xf32, #tpu.memory_space<vmem>>, vector<8x8xf32>
    %cst_114 = arith.constant dense<0.000000e+00> : vector<2x8xf32>
    %366 = tpu.matmul %364, %365, %cst_114 {dimension_numbers = #tpu.dot_dimension_numbers<[1], [0], [0], [1], [0, 0, 1, 1], [], []>} : vector<2x8xf32>, vector<8x8xf32>, vector<2x8xf32> -> vector<2x8xf32>
    %c0_115 = arith.constant 0 : index
    %c0_116 = arith.constant 0 : index
    %367 = vector.load %arg6[%c0_115, %c0_116] : memref<2x8xf32, #tpu.memory_space<vmem>>, vector<1x8xf32>
    %368 = vector.broadcast %367 : vector<1x8xf32> to vector<2x8xf32>
    %369 = arith.addf %366, %368 : vector<2x8xf32>
    %cst_117 = arith.constant 0.000000e+00 : f32
    %370 = vector.broadcast %cst_117 : f32 to vector<2x8xf32>
    %371 = arith.maximumf %369, %370 : vector<2x8xf32>
    %c8 = arith.constant 8 : index
    %c0_118 = arith.constant 0 : index
    %372 = vector.load %arg5[%c8, %c0_118] : memref<16x8xf32, #tpu.memory_space<vmem>>, vector<8x8xf32>
    %cst_119 = arith.constant dense<0.000000e+00> : vector<2x8xf32>
    %373 = tpu.matmul %371, %372, %cst_119 {dimension_numbers = #tpu.dot_dimension_numbers<[1], [0], [0], [1], [0, 0, 1, 1], [], []>} : vector<2x8xf32>, vector<8x8xf32>, vector<2x8xf32> -> vector<2x8xf32>
    %c1_120 = arith.constant 1 : index
    %c0_121 = arith.constant 0 : index
    %374 = vector.load %arg6[%c1_120, %c0_121] : memref<2x8xf32, #tpu.memory_space<vmem>>, vector<1x8xf32>
    %375 = vector.broadcast %374 : vector<1x8xf32> to vector<2x8xf32>
    %376 = arith.addf %373, %375 : vector<2x8xf32>
    %cst_122 = arith.constant 0.000000e+00 : f32
    %377 = vector.broadcast %cst_122 : f32 to vector<2x8xf32>
    %378 = arith.maximumf %376, %377 : vector<2x8xf32>
    %c0_123 = arith.constant 0 : index
    %c0_124 = arith.constant 0 : index
    %379 = vector.load %arg7[%c0_123, %c0_124] : memref<40x32xf32, #tpu.memory_space<vmem>>, vector<32x32xf32>
    %cst_125 = arith.constant dense<0.000000e+00> : vector<2x32xf32>
    %380 = tpu.matmul %363, %379, %cst_125 {dimension_numbers = #tpu.dot_dimension_numbers<[1], [0], [0], [1], [0, 0, 1, 1], [], []>} : vector<2x32xf32>, vector<32x32xf32>, vector<2x32xf32> -> vector<2x32xf32>
    %c32_126 = arith.constant 32 : index
    %c0_127 = arith.constant 0 : index
    %381 = vector.load %arg7[%c32_126, %c0_127] : memref<40x32xf32, #tpu.memory_space<vmem>>, vector<8x32xf32>
    %cst_128 = arith.constant dense<0.000000e+00> : vector<2x32xf32>
    %382 = tpu.matmul %378, %381, %cst_128 {dimension_numbers = #tpu.dot_dimension_numbers<[1], [0], [0], [1], [0, 0, 1, 1], [], []>} : vector<2x8xf32>, vector<8x32xf32>, vector<2x32xf32> -> vector<2x32xf32>
    %383 = arith.addf %380, %382 : vector<2x32xf32>
    %c0_129 = arith.constant 0 : index
    %c0_130 = arith.constant 0 : index
    %384 = vector.load %arg8[%c0_129, %c0_130] : memref<1x32xf32, #tpu.memory_space<vmem>>, vector<1x32xf32>
    %385 = vector.broadcast %384 : vector<1x32xf32> to vector<2x32xf32>
    %386 = arith.addf %383, %385 : vector<2x32xf32>
    %cst_131 = arith.constant 0.000000e+00 : f32
    %387 = vector.broadcast %cst_131 : f32 to vector<2x32xf32>
    %388 = arith.maximumf %386, %387 : vector<2x32xf32>
    %c0_132 = arith.constant 0 : index
    %c0_133 = arith.constant 0 : index
    %389 = vector.load %arg9[%c0_132, %c0_133] : memref<32x11xf32, #tpu.memory_space<vmem>>, vector<32x11xf32>
    %cst_134 = arith.constant dense<0.000000e+00> : vector<2x11xf32>
    %390 = tpu.matmul %388, %389, %cst_134 {dimension_numbers = #tpu.dot_dimension_numbers<[1], [0], [0], [1], [0, 0, 1, 1], [], []>} : vector<2x32xf32>, vector<32x11xf32>, vector<2x11xf32> -> vector<2x11xf32>
    %c0_135 = arith.constant 0 : index
    %c0_136 = arith.constant 0 : index
    %391 = vector.load %arg10[%c0_135, %c0_136] : memref<1x11xf32, #tpu.memory_space<vmem>>, vector<1x11xf32>
    %392 = vector.broadcast %391 : vector<1x11xf32> to vector<2x11xf32>
    %393 = arith.addf %390, %392 : vector<2x11xf32>
    %394 = tpu.iota {dimensions = array<i32: 1>} : vector<2x11xi32>
    %c10_i32 = arith.constant 10 : i32
    %395 = vector.broadcast %c10_i32 : i32 to vector<2x11xi32>
    %396 = arith.cmpi slt, %394, %395 : vector<2x11xi32>
    %cst_137 = arith.constant 0xFF800000 : f32
    %397 = vector.broadcast %cst_137 : f32 to vector<2x11xf32>
    %398 = arith.select %396, %393, %397 : vector<2x11xi1>, vector<2x11xf32>
    %cst_138 = arith.constant dense<0xFF800000> : vector<2xf32>
    %399 = vector.multi_reduction <maximumf>, %398, %cst_138 [1] : vector<2x11xf32> to vector<2xf32>
    %400 = vector.shape_cast %399 : vector<2xf32> to vector<2x1xf32>
    %401 = vector.broadcast %400 : vector<2x1xf32> to vector<2x11xf32>
    %402 = arith.subf %393, %401 : vector<2x11xf32>
    %403 = math.exp %402 : vector<2x11xf32>
    %cst_139 = arith.constant 0.000000e+00 : f32
    %404 = vector.broadcast %cst_139 : f32 to vector<2x11xf32>
    %405 = arith.select %396, %403, %404 : vector<2x11xi1>, vector<2x11xf32>
    %cst_140 = arith.constant dense<0.000000e+00> : vector<2xf32>
    %406 = vector.multi_reduction <add>, %405, %cst_140 [1] : vector<2x11xf32> to vector<2xf32>
    %407 = vector.shape_cast %406 : vector<2xf32> to vector<2x1xf32>
    %408 = vector.broadcast %407 : vector<2x1xf32> to vector<2x11xf32>
    %409 = arith.divf %405, %408 : vector<2x11xf32>
    %410 = arith.select %396, %409, %393 : vector<2x11xi1>, vector<2x11xf32>
    %c0_141 = arith.constant 0 : index
    %c0_142 = arith.constant 0 : index
    %411 = vector.load %arg11[%c0_141, %c0_142] : memref<2x11xf32, #tpu.memory_space<vmem>>, vector<2x11xf32>
    tpu.vector_store %arg11[%c0_141, %c0_142], %410 {strides = array<i32>} : memref<2x11xf32, #tpu.memory_space<vmem>>, vector<2x11xf32>,
    return
  }
}

</mosaic_0001>

<llo_original>
// kernel: tpu_custom_call.1
$region0: #{tpu_custom_call.1}
  #allocation0 [shape = 'u32[]', space=smem, size = 0x4, offset = 0x4, fixed_abs, tag = 'smem constant byte address 0x4 - core index']
  #allocation1 [shape = 'u32[144,128]{1,0:T(1,128)}', space=vmem, size = 0x12000, scoped, tag = 'internal scratch']
  #allocation2 [shape = 'f32[16,128]{1,0:T(8,128)}', space=vmem, size = 0x2000, scoped, tag = 'scratch operand']
  #allocation3 [shape = 'f32[16,32]{1,0:T(8,128)}', space=vmem, size = 0x2000, scoped, tag = 'scratch operand']
  %s0 = inlined_call_operand.hbm [shape: f32[16,16], index: 0, kind: input, shape index: {}]
  %s1 = inlined_call_operand.vmem [shape: f32[2,8], index: 1, kind: input, shape index: {}]
  %s2 = inlined_call_operand.vmem [shape: f32[48,128], index: 2, kind: input, shape index: {}]
  %s3 = inlined_call_operand.vmem [shape: f32[64,128], index: 3, kind: input, shape index: {}]
  %s4 = inlined_call_operand.hbm [shape: f32[2,128], index: 4, kind: input, shape index: {}]
  %s5 = inlined_call_operand.vmem [shape: f32[16,8], index: 5, kind: input, shape index: {}]
  %s6 = inlined_call_operand.vmem [shape: f32[2,8], index: 6, kind: input, shape index: {}]
  %s7 = inlined_call_operand.vmem [shape: f32[40,32], index: 7, kind: input, shape index: {}]
  %s8 = inlined_call_operand.vmem [shape: f32[1,32], index: 8, kind: input, shape index: {}]
  %s9 = inlined_call_operand.vmem [shape: f32[32,11], index: 9, kind: input, shape index: {}]
  %s10 = inlined_call_operand.vmem [shape: f32[1,11], index: 10, kind: input, shape index: {}]
  %s11 = inlined_call_operand.hbm [shape: f32[2,11], index: 11, kind: output, shape index: {}]
  %s12 = sld [smem:[#allocation0]]
  $region62: #{tpu_custom_call.1} parent=0
    _
  %s14 = ssub.s32 1, %s12
  %s15 = scalar_select 0, %s14, %s12
  $region1: #{tpu_custom_call.1} parent=0
    #allocation4 [shape = 'u8[8192]{0}', space=vmem, size = 0x2000, scoped, tag = 'input window, operand 0, single buffered']
    #allocation5 [shape = 's32[1]{0}', space=sflag, size = 0x4, scoped, tag = 'scoped memory for tpu_custom_call.1']
    #allocation6 [shape = 's32[1]{0}', space=sflag, size = 0x4, scoped, tag = 'scoped memory for tpu_custom_call.1']
    #allocation7 [shape = 'u8[1024]{0}', space=vmem, size = 0x400, scoped, tag = 'input window, operand 4, single buffered']
    #allocation8 [shape = 's32[1]{0}', space=sflag, size = 0x4, scoped, tag = 'scoped memory for tpu_custom_call.1']
    #allocation9 [shape = 'u8[1024]{0}', space=vmem, size = 0x400, scoped, tag = 'output window, operand 0, single buffered']
    %16 = vsyncpa [#allocation5], 0
    %17 = vsyncpa [#allocation8], 0
    %18 = vsyncpa [#allocation6], 0
    // Predicated region
    $region2: #{tpu_custom_call.1} parent=1 // pred_check
      _
    $region3: #{tpu_custom_call.1} parent=1 // pred_check_branch
      %20 = sbr.rel (0) target = $region5
    $region4: #{tpu_custom_call.1} parent=1 // pred_region
      %s22 = ssub.s32 256, 256
      %23 = vsyncadd [#allocation5], %s22
      %s24 = sshll.u32 [#allocation4], 4
      %s25 = int_to_ptr.vmem [resolvable:$true] %s24
      %30 = dma.hbm_to_vmem [thread:$0]  %s0, 256, %s25, [#allocation5], 128, 128, 8
    $region5: #{tpu_custom_call.1} parent=1 // pred_fallthru
      _
    // Predicated region
    $region6: #{tpu_custom_call.1} parent=1 // pred_check
      _
    $region7: #{tpu_custom_call.1} parent=1 // pred_check_branch
      %32 = sbr.rel (0) target = $region9
    $region8: #{tpu_custom_call.1} parent=1 // pred_region
      _
    $region9: #{tpu_custom_call.1} parent=1 // pred_fallthru
      _
    // Predicated region
    $region10: #{tpu_custom_call.1} parent=1 // pred_check
      _
    $region11: #{tpu_custom_call.1} parent=1 // pred_check_branch
      %34 = sbr.rel (0) target = $region13
    $region12: #{tpu_custom_call.1} parent=1 // pred_region
      _
    $region13: #{tpu_custom_call.1} parent=1 // pred_fallthru
      _
    // Predicated region
    $region14: #{tpu_custom_call.1} parent=1 // pred_check
      _
    $region15: #{tpu_custom_call.1} parent=1 // pred_check_branch
      %36 = sbr.rel (0) target = $region17
    $region16: #{tpu_custom_call.1} parent=1 // pred_region
      _
    $region17: #{tpu_custom_call.1} parent=1 // pred_fallthru
      _
    // Predicated region
    $region18: #{tpu_custom_call.1} parent=1 // pred_check
      _
    $region19: #{tpu_custom_call.1} parent=1 // pred_check_branch
      %38 = sbr.rel (0) target = $region21
    $region20: #{tpu_custom_call.1} parent=1 // pred_region
      %s40 = ssub.s32 32, 32
      %41 = vsyncadd [#allocation8], %s40
      %s43 = sshll.u32 [#allocation7], 4
      %s44 = int_to_ptr.vmem [resolvable:$true] %s43
      %46 = dma.hbm_to_vmem [thread:$0]  %s4, 32, %s44, [#allocation8]
    $region21: #{tpu_custom_call.1} parent=1 // pred_fallthru
      _
    // Predicated region
    $region22: #{tpu_custom_call.1} parent=1 // pred_check
      _
    $region23: #{tpu_custom_call.1} parent=1 // pred_check_branch
      %48 = sbr.rel (0) target = $region25
    $region24: #{tpu_custom_call.1} parent=1 // pred_region
      _
    $region25: #{tpu_custom_call.1} parent=1 // pred_fallthru
      _
    // Predicated region
    $region26: #{tpu_custom_call.1} parent=1 // pred_check
      _
    $region27: #{tpu_custom_call.1} parent=1 // pred_check_branch
      %50 = sbr.rel (0) target = $region29
    $region28: #{tpu_custom_call.1} parent=1 // pred_region
      _
    $region29: #{tpu_custom_call.1} parent=1 // pred_fallthru
      _
    // Predicated region
    $region30: #{tpu_custom_call.1} parent=1 // pred_check
      _
    $region31: #{tpu_custom_call.1} parent=1 // pred_check_branch
      %52 = sbr.rel (0) target = $region33
    $region32: #{tpu_custom_call.1} parent=1 // pred_region
      _
    $region33: #{tpu_custom_call.1} parent=1 // pred_fallthru
      _
    // Predicated region
    $region34: #{tpu_custom_call.1} parent=1 // pred_check
      _
    $region35: #{tpu_custom_call.1} parent=1 // pred_check_branch
      %54 = sbr.rel (0) target = $region37
    $region36: #{tpu_custom_call.1} parent=1 // pred_region
      _
    $region37: #{tpu_custom_call.1} parent=1 // pred_fallthru
      _
    // Predicated region
    $region38: #{tpu_custom_call.1} parent=1 // pred_check
      _
    $region39: #{tpu_custom_call.1} parent=1 // pred_check_branch
      %56 = sbr.rel (0) target = $region41
    $region40: #{tpu_custom_call.1} parent=1 // pred_region
      _
    $region41: #{tpu_custom_call.1} parent=1 // pred_fallthru
      _
    // Predicated region
    $region42: #{tpu_custom_call.1} parent=1 // pred_check
      _
    $region43: #{tpu_custom_call.1} parent=1 // pred_check_branch
      %58 = sbr.rel (0) target = $region45
    $region44: #{tpu_custom_call.1} parent=1 // pred_region
      _
    $region45: #{tpu_custom_call.1} parent=1 // pred_fallthru
      _
    // Predicated region
    $region46: #{tpu_custom_call.1} parent=1 // pred_check
      _
    $region47: #{tpu_custom_call.1} parent=1 // pred_check_branch
      %60 = sbr.rel (0) target = $region49
    $region48: #{tpu_custom_call.1} parent=1 // pred_region
      %61 = dma.done [#allocation5], 256
    $region49: #{tpu_custom_call.1} parent=1 // pred_fallthru
      _
    // Predicated region
    $region50: #{tpu_custom_call.1} parent=1 // pred_check
      _
    $region51: #{tpu_custom_call.1} parent=1 // pred_check_branch
      %63 = sbr.rel (0) target = $region53
    $region52: #{tpu_custom_call.1} parent=1 // pred_region
      %64 = dma.done [#allocation8], 32
    $region53: #{tpu_custom_call.1} parent=1 // pred_fallthru
      _
    %v65 = vld [vmem:[%s2] sm:$0xff]
    %v66 = vld [vmem:[%s2 + $0x8] sm:$0xff]
    %v67 = vld [vmem:[%s2 + $0x10] sm:$0xff]
    %v68 = vld [vmem:[%s2 + $0x18] sm:$0xff]
    %v69 = vld [vmem:[%s2 + $0x20] sm:$0xff]
    %v70 = vld [vmem:[%s2 + $0x28] sm:$0xff]
    %v71 = vld [vmem:[#allocation7] sm:$0x1]
    %v72 = vld [vmem:[#allocation4] sm:$0xff]
    %v73 = vld [vmem:[#allocation4 + $0x8] sm:$0xff]
    %v74 = vlaneseq
    %v75 = vshrl.u32 %v74, 7
    %v76 = vsub.s32 0, %v75
    %v77 = vrot.slane %v71, %v76
    %vm78 = vcmask 130048
    %v80 = vsel %vm78, %v72, 0
    %v83 = vsel %vm78, %v73, 0
    %85 = vmatprep.subr.mxu0 0.0
    %86 = vmatpush1.msra.mxu0 %v65
    %87 = vmatprep.subr.mxu0 0.0
    %88 = vmatpush1.msra.mxu0 %v66
    %89 = vmatprep.subr.mxu0 0.0
    %90 = vmatpush1.msra.mxu0 0.0
    %91 = vmatprep.subr.mxu0 0.0
    %92 = vmatpush1.msra.mxu0 0.0
    %93 = vmatprep.subr.mxu0 0.0
    %94 = vmatpush1.msra.mxu0 0.0
    %95 = vmatprep.subr.mxu0 0.0
    %96 = vmatpush1.msra.mxu0 0.0
    %97 = vmatprep.subr.mxu0 0.0
    %98 = vmatpush1.msra.mxu0 0.0
    %99 = vmatprep.subr.mxu0 0.0
    %100 = vmatpush1.msra.mxu0 0.0
    %101 = vmatprep.subr.mxu0 0.0
    %102 = vmatpush1.msra.mxu0 0.0
    %103 = vmatprep.subr.mxu0 0.0
    %104 = vmatpush1.msra.mxu0 0.0
    %105 = vmatprep.subr.mxu0 0.0
    %106 = vmatpush1.msra.mxu0 0.0
    %107 = vmatprep.subr.mxu0 0.0
    %108 = vmatpush1.msra.mxu0 0.0
    %109 = vmatprep.subr.mxu0 0.0
    %110 = vmatpush1.msra.mxu0 0.0
    %111 = vmatprep.subr.mxu0 0.0
    %112 = vmatpush1.msra.mxu0 0.0
    %113 = vmatprep.subr.mxu0 0.0
    %114 = vmatpush1.msra.mxu0 0.0
    %115 = vmatprep.subr.mxu0 0.0
    %116 = vmatpush1.msra.mxu0 0.0
    %117 = vmatprep.subr.mxu0 0.0
    %118 = vmatpush1.msra.mxu0 0.0
    %119 = vmatprep.subr.mxu0 0.0
    %120 = vmatpush1.msra.mxu0 0.0
    %121 = vmatprep.subr.mxu0 0.0
    %122 = vmatpush1.msra.mxu0 0.0
    %123 = vmatprep.subr.mxu0 0.0
    %124 = vmatpush1.msra.mxu0 0.0
    %125 = vmatprep.subr.mxu0 0.0
    %126 = vmatpush1.msra.mxu0 0.0
    %127 = vmatprep.subr.mxu0 0.0
    %128 = vmatpush1.msra.mxu0 0.0
    %129 = vmatprep.subr.mxu0 0.0
    %130 = vmatpush1.msra.mxu0 0.0
    %131 = vmatprep.subr.mxu0 0.0
    %132 = vmatpush1.msra.mxu0 0.0
    %133 = vmatprep.subr.mxu0 0.0
    %134 = vmatpush1.msra.mxu0 0.0
    %135 = vmatprep.subr.mxu0 0.0
    %136 = vmatpush1.msra.mxu0 0.0
    %137 = vmatprep.subr.mxu0 0.0
    %138 = vmatpush1.msra.mxu0 0.0
    %139 = vmatprep.subr.mxu0 0.0
    %140 = vmatpush1.msra.mxu0 0.0
    %141 = vmatprep.subr.mxu0 0.0
    %142 = vmatpush1.msra.mxu0 0.0
    %143 = vmatprep.subr.mxu0 0.0
    %144 = vmatpush1.msra.mxu0 0.0
    %145 = vmatprep.subr.mxu0 0.0
    %146 = vmatpush1.msra.mxu0 0.0
    %147 = vmatprep.subr.mxu0 0.0
    %148 = vmatpush1.msra.mxu0 0.0
    %149 = vmatprep.mubr.f32.mxu0 0.0
    %150 = vmatmul.mubr.f32.gmra.mrb[0].mxu0 %v80
    %v151 = vpop.f32.mrb[0].mxu0
    %v152 = vadd.f32 %v77, %v151
    %v153 = vpop.f32.mrb[0].mxu0
    %154 = vmatprep.mubr.f32.mxu0 0.0
    %155 = vmatmul.mubr.f32.gmra.mrb[0].mxu0 %v83
    %v156 = vpop.f32.mrb[0].mxu0
    %v157 = vadd.f32 %v77, %v156
    %v158 = vpop.f32.mrb[0].mxu0
    %159 = vdwg.mxu0
    %160 = vst [vmem:[#allocation2] sm:$0xff] %v152
    %161 = vst [vmem:[#allocation2 + $0x8] sm:$0xff] %v157
    %v162 = vld [vmem:[#allocation2] sm:$0x3]
    %vm163 = vcmask 261120
    %v165 = vsel %vm163, 0.0, 0
    %167 = vmatprep.subr.mxu0 0.0
    %168 = vmatpush1.msra.mxu0 %v67
    %169 = vmatprep.subr.mxu0 0.0
    %170 = vmatpush1.msra.mxu0 %v68
    %171 = vmatprep.subr.mxu0 0.0
    %172 = vmatpush1.msra.mxu0 %v69
    %173 = vmatprep.subr.mxu0 0.0
    %174 = vmatpush1.msra.mxu0 %v70
    %175 = vmatprep.subr.mxu0 0.0
    %176 = vmatpush1.msra.mxu0 0.0
    %177 = vmatprep.subr.mxu0 0.0
    %178 = vmatpush1.msra.mxu0 0.0
    %179 = vmatprep.subr.mxu0 0.0
    %180 = vmatpush1.msra.mxu0 0.0
    %181 = vmatprep.subr.mxu0 0.0
    %182 = vmatpush1.msra.mxu0 0.0
    %183 = vmatprep.subr.mxu0 0.0
    %184 = vmatpush1.msra.mxu0 0.0
    %185 = vmatprep.subr.mxu0 0.0
    %186 = vmatpush1.msra.mxu0 0.0
    %187 = vmatprep.subr.mxu0 0.0
    %188 = vmatpush1.msra.mxu0 0.0
    %189 = vmatprep.subr.mxu0 0.0
    %190 = vmatpush1.msra.mxu0 0.0
    %191 = vmatprep.subr.mxu0 0.0
    %192 = vmatpush1.msra.mxu0 0.0
    %193 = vmatprep.subr.mxu0 0.0
    %194 = vmatpush1.msra.mxu0 0.0
    %195 = vmatprep.subr.mxu0 0.0
    %196 = vmatpush1.msra.mxu0 0.0
    %197 = vmatprep.subr.mxu0 0.0
    %198 = vmatpush1.msra.mxu0 0.0
    %199 = vmatprep.subr.mxu0 0.0
    %200 = vmatpush1.msra.mxu0 0.0
    %201 = vmatprep.subr.mxu0 0.0
    %202 = vmatpush1.msra.mxu0 0.0
    %203 = vmatprep.subr.mxu0 0.0
    %204 = vmatpush1.msra.mxu0 0.0
    %205 = vmatprep.subr.mxu0 0.0
    %206 = vmatpush1.msra.mxu0 0.0
    %207 = vmatprep.subr.mxu0 0.0
    %208 = vmatpush1.msra.mxu0 0.0
    %209 = vmatprep.subr.mxu0 0.0
    %210 = vmatpush1.msra.mxu0 0.0
    %211 = vmatprep.subr.mxu0 0.0
    %212 = vmatpush1.msra.mxu0 0.0
    %213 = vmatprep.subr.mxu0 0.0
    %214 = vmatpush1.msra.mxu0 0.0
    %215 = vmatprep.subr.mxu0 0.0
    %216 = vmatpush1.msra.mxu0 0.0
    %217 = vmatprep.subr.mxu0 0.0
    %218 = vmatpush1.msra.mxu0 0.0
    %219 = vmatprep.subr.mxu0 0.0
    %220 = vmatpush1.msra.mxu0 0.0
    %221 = vmatprep.subr.mxu0 0.0
    %222 = vmatpush1.msra.mxu0 0.0
    %223 = vmatprep.subr.mxu0 0.0
    %224 = vmatpush1.msra.mxu0 0.0
    %225 = vmatprep.subr.mxu0 0.0
    %226 = vmatpush1.msra.mxu0 0.0
    %227 = vmatprep.subr.mxu0 0.0
    %228 = vmatpush1.msra.mxu0 0.0
    %229 = vmatprep.subr.mxu0 0.0
    %230 = vmatpush1.msra.mxu0 0.0
    %231 = vmatprep.mubr.f32.mxu0 0.0
    %232 = vmatmul.mubr.f32.gmra.mrb[0].mxu0 %v165
    %v233 = vpop.f32.mrb[0].mxu0
    %v234 = vadd.f32 0.0, %v233
    %v235 = vpop.f32.mrb[0].mxu0
    %236 = vdwg.mxu0
    %v237 = vadd.f32 %v162, %v234
    %v238 = vxor.u32 %v237, 2147483648
    %v239 = vmul.f32 %v238, 1.442695
    %v240 = vpow.pop %v239
    %v241 = vadd.f32 %v240, 1.0
    %v242 = vrcp.pop %v241
    %v243 = vmul.f32 1.0, %v242
    %v244 = vtanh.pop %v237
    %v245 = vmul.f32 %v243, 0.0
    %247 = vrot.lane.b32.xlu0 %v244, 64
    %v248 = vpop.permute.xlu0 %247
    %v250 = vmul.f32 %v243, %v248
    %252 = vrot.lane.b32.xlu0 %v250, 32
    %v253 = vpop.permute.xlu0 %252
    %v255 = vadd.f32 %v245, %v253
    %v256 = vtanh.pop %v255
    %258 = vrot.lane.b32.xlu0 %v256, 64
    %v259 = vpop.permute.xlu0 %258
    %v261 = vmul.f32 %v243, %v259
    %263 = vrot.lane.b32.xlu0 %v261, 32
    %v264 = vpop.permute.xlu0 %263
    %vm266 = vcmask 254976
    %267 = vst.msk [vmem:[#allocation3] sm:$0x3] %vm266, %v264
    %v268 = vld [vmem:[#allocation2 + $0x2] sm:$0x3]
    %v269 = vsel %vm163, %v264, 0
    %271 = vmatprep.subr.mxu0 0.0
    %272 = vmatpush1.msra.mxu0 %v67
    %273 = vmatprep.subr.mxu0 0.0
    %274 = vmatpush1.msra.mxu0 %v68
    %275 = vmatprep.subr.mxu0 0.0
    %276 = vmatpush1.msra.mxu0 %v69
    %277 = vmatprep.subr.mxu0 0.0
    %278 = vmatpush1.msra.mxu0 %v70
    %279 = vmatprep.subr.mxu0 0.0
    %280 = vmatpush1.msra.mxu0 0.0
    %281 = vmatprep.subr.mxu0 0.0
    %282 = vmatpush1.msra.mxu0 0.0
    %283 = vmatprep.subr.mxu0 0.0
    %284 = vmatpush1.msra.mxu0 0.0
    %285 = vmatprep.subr.mxu0 0.0
    %286 = vmatpush1.msra.mxu0 0.0
    %287 = vmatprep.subr.mxu0 0.0
    %288 = vmatpush1.msra.mxu0 0.0
    %289 = vmatprep.subr.mxu0 0.0
    %290 = vmatpush1.msra.mxu0 0.0
    %291 = vmatprep.subr.mxu0 0.0
    %292 = vmatpush1.msra.mxu0 0.0
    %293 = vmatprep.subr.mxu0 0.0
    %294 = vmatpush1.msra.mxu0 0.0
    %295 = vmatprep.subr.mxu0 0.0
    %296 = vmatpush1.msra.mxu0 0.0
    %297 = vmatprep.subr.mxu0 0.0
    %298 = vmatpush1.msra.mxu0 0.0
    %299 = vmatprep.subr.mxu0 0.0
    %300 = vmatpush1.msra.mxu0 0.0
    %301 = vmatprep.subr.mxu0 0.0
    %302 = vmatpush1.msra.mxu0 0.0
    %303 = vmatprep.subr.mxu0 0.0
    %304 = vmatpush1.msra.mxu0 0.0
    %305 = vmatprep.subr.mxu0 0.0
    %306 = vmatpush1.msra.mxu0 0.0
    %307 = vmatprep.subr.mxu0 0.0
    %308 = vmatpush1.msra.mxu0 0.0
    %309 = vmatprep.subr.mxu0 0.0
    %310 = vmatpush1.msra.mxu0 0.0
    %311 = vmatprep.subr.mxu0 0.0
    %312 = vmatpush1.msra.mxu0 0.0
    %313 = vmatprep.subr.mxu0 0.0
    %314 = vmatpush1.msra.mxu0 0.0
    %315 = vmatprep.subr.mxu0 0.0
    %316 = vmatpush1.msra.mxu0 0.0
    %317 = vmatprep.subr.mxu0 0.0
    %318 = vmatpush1.msra.mxu0 0.0
    %319 = vmatprep.subr.mxu0 0.0
    %320 = vmatpush1.msra.mxu0 0.0
    %321 = vmatprep.subr.mxu0 0.0
    %322 = vmatpush1.msra.mxu0 0.0
    %323 = vmatprep.subr.mxu0 0.0
    %324 = vmatpush1.msra.mxu0 0.0
    %325 = vmatprep.subr.mxu0 0.0
    %326 = vmatpush1.msra.mxu0 0.0
    %327 = vmatprep.subr.mxu0 0.0
    %328 = vmatpush1.msra.mxu0 0.0
    %329 = vmatprep.subr.mxu0 0.0
    %330 = vmatpush1.msra.mxu0 0.0
    %331 = vmatprep.subr.mxu0 0.0
    %332 = vmatpush1.msra.mxu0 0.0
    %333 = vmatprep.subr.mxu0 0.0
    %334 = vmatpush1.msra.mxu0 0.0
    %335 = vmatprep.mubr.f32.mxu0 0.0
    %336 = vmatmul.mubr.f32.gmra.mrb[0].mxu0 %v269
    %v337 = vpop.f32.mrb[0].mxu0
    %v338 = vadd.f32 0.0, %v337
    %v339 = vpop.f32.mrb[0].mxu0
    %340 = vdwg.mxu0
    %v341 = vadd.f32 %v268, %v338
    %v342 = vxor.u32 %v341, 2147483648
    %v343 = vmul.f32 %v342, 1.442695
    %v344 = vpow.pop %v343
    %v345 = vadd.f32 %v344, 1.0
    %v346 = vrcp.pop %v345
    %v347 = vmul.f32 1.0, %v346
    %v348 = vtanh.pop %v341
    %v349 = vmul.f32 %v347, %v255
    %351 = vrot.lane.b32.xlu0 %v348, 64
    %v352 = vpop.permute.xlu0 %351
    %v354 = vmul.f32 %v347, %v352
    %356 = vrot.lane.b32.xlu0 %v354, 32
    %v357 = vpop.permute.xlu0 %356
    %v359 = vadd.f32 %v349, %v357
    %v360 = vtanh.pop %v359
    %362 = vrot.lane.b32.xlu0 %v360, 64
    %v363 = vpop.permute.xlu0 %362
    %v365 = vmul.f32 %v347, %v363
    %367 = vrot.lane.b32.xlu0 %v365, 32
    %v368 = vpop.permute.xlu0 %367
    %370 = vst.msk [vmem:[#allocation3 + $0x2] sm:$0x3] %vm266, %v368
    %v371 = vld [vmem:[#allocation2 + $0x4] sm:$0x3]
    %v372 = vsel %vm163, %v368, 0
    %374 = vmatprep.subr.mxu0 0.0
    %375 = vmatpush1.msra.mxu0 %v67
    %376 = vmatprep.subr.mxu0 0.0
    %377 = vmatpush1.msra.mxu0 %v68
    %378 = vmatprep.subr.mxu0 0.0
    %379 = vmatpush1.msra.mxu0 %v69
    %380 = vmatprep.subr.mxu0 0.0
    %381 = vmatpush1.msra.mxu0 %v70
    %382 = vmatprep.subr.mxu0 0.0
    %383 = vmatpush1.msra.mxu0 0.0
    %384 = vmatprep.subr.mxu0 0.0
    %385 = vmatpush1.msra.mxu0 0.0
    %386 = vmatprep.subr.mxu0 0.0
    %387 = vmatpush1.msra.mxu0 0.0
    %388 = vmatprep.subr.mxu0 0.0
    %389 = vmatpush1.msra.mxu0 0.0
    %390 = vmatprep.subr.mxu0 0.0
    %391 = vmatpush1.msra.mxu0 0.0
    %392 = vmatprep.subr.mxu0 0.0
    %393 = vmatpush1.msra.mxu0 0.0
    %394 = vmatprep.subr.mxu0 0.0
    %395 = vmatpush1.msra.mxu0 0.0
    %396 = vmatprep.subr.mxu0 0.0
    %397 = vmatpush1.msra.mxu0 0.0
    %398 = vmatprep.subr.mxu0 0.0
    %399 = vmatpush1.msra.mxu0 0.0
    %400 = vmatprep.subr.mxu0 0.0
    %401 = vmatpush1.msra.mxu0 0.0
    %402 = vmatprep.subr.mxu0 0.0
    %403 = vmatpush1.msra.mxu0 0.0
    %404 = vmatprep.subr.mxu0 0.0
    %405 = vmatpush1.msra.mxu0 0.0
    %406 = vmatprep.subr.mxu0 0.0
    %407 = vmatpush1.msra.mxu0 0.0
    %408 = vmatprep.subr.mxu0 0.0
    %409 = vmatpush1.msra.mxu0 0.0
    %410 = vmatprep.subr.mxu0 0.0
    %411 = vmatpush1.msra.mxu0 0.0
    %412 = vmatprep.subr.mxu0 0.0
    %413 = vmatpush1.msra.mxu0 0.0
    %414 = vmatprep.subr.mxu0 0.0
    %415 = vmatpush1.msra.mxu0 0.0
    %416 = vmatprep.subr.mxu0 0.0
    %417 = vmatpush1.msra.mxu0 0.0
    %418 = vmatprep.subr.mxu0 0.0
    %419 = vmatpush1.msra.mxu0 0.0
    %420 = vmatprep.subr.mxu0 0.0
    %421 = vmatpush1.msra.mxu0 0.0
    %422 = vmatprep.subr.mxu0 0.0
    %423 = vmatpush1.msra.mxu0 0.0
    %424 = vmatprep.subr.mxu0 0.0
    %425 = vmatpush1.msra.mxu0 0.0
    %426 = vmatprep.subr.mxu0 0.0
    %427 = vmatpush1.msra.mxu0 0.0
    %428 = vmatprep.subr.mxu0 0.0
    %429 = vmatpush1.msra.mxu0 0.0
    %430 = vmatprep.subr.mxu0 0.0
    %431 = vmatpush1.msra.mxu0 0.0
    %432 = vmatprep.subr.mxu0 0.0
    %433 = vmatpush1.msra.mxu0 0.0
    %434 = vmatprep.subr.mxu0 0.0
    %435 = vmatpush1.msra.mxu0 0.0
    %436 = vmatprep.subr.mxu0 0.0
    %437 = vmatpush1.msra.mxu0 0.0
    %438 = vmatprep.mubr.f32.mxu0 0.0
    %439 = vmatmul.mubr.f32.gmra.mrb[0].mxu0 %v372
    %v440 = vpop.f32.mrb[0].mxu0
    %v441 = vadd.f32 0.0, %v440
    %v442 = vpop.f32.mrb[0].mxu0
    %443 = vdwg.mxu0
    %v444 = vadd.f32 %v371, %v441
    %v445 = vxor.u32 %v444, 2147483648
    %v446 = vmul.f32 %v445, 1.442695
    %v447 = vpow.pop %v446
    %v448 = vadd.f32 %v447, 1.0
    %v449 = vrcp.pop %v448
    %v450 = vmul.f32 1.0, %v449
    %v451 = vtanh.pop %v444
    %v452 = vmul.f32 %v450, %v359
    %454 = vrot.lane.b32.xlu0 %v451, 64
    %v455 = vpop.permute.xlu0 %454
    %v457 = vmul.f32 %v450, %v455
    %459 = vrot.lane.b32.xlu0 %v457, 32
    %v460 = vpop.permute.xlu0 %459
    %v462 = vadd.f32 %v452, %v460
    %v463 = vtanh.pop %v462
    %465 = vrot.lane.b32.xlu0 %v463, 64
    %v466 = vpop.permute.xlu0 %465
    %v468 = vmul.f32 %v450, %v466
    %470 = vrot.lane.b32.xlu0 %v468, 32
    %v471 = vpop.permute.xlu0 %470
    %473 = vst.msk [vmem:[#allocation3 + $0x4] sm:$0x3] %vm266, %v471
    %v474 = vld [vmem:[#allocation2 + $0x6] sm:$0x3]
    %v475 = vsel %vm163, %v471, 0
    %477 = vmatprep.subr.mxu0 0.0
    %478 = vmatpush1.msra.mxu0 %v67
    %479 = vmatprep.subr.mxu0 0.0
    %480 = vmatpush1.msra.mxu0 %v68
    %481 = vmatprep.subr.mxu0 0.0
    %482 = vmatpush1.msra.mxu0 %v69
    %483 = vmatprep.subr.mxu0 0.0
    %484 = vmatpush1.msra.mxu0 %v70
    %485 = vmatprep.subr.mxu0 0.0
    %486 = vmatpush1.msra.mxu0 0.0
    %487 = vmatprep.subr.mxu0 0.0
    %488 = vmatpush1.msra.mxu0 0.0
    %489 = vmatprep.subr.mxu0 0.0
    %490 = vmatpush1.msra.mxu0 0.0
    %491 = vmatprep.subr.mxu0 0.0
    %492 = vmatpush1.msra.mxu0 0.0
    %493 = vmatprep.subr.mxu0 0.0
    %494 = vmatpush1.msra.mxu0 0.0
    %495 = vmatprep.subr.mxu0 0.0
    %496 = vmatpush1.msra.mxu0 0.0
    %497 = vmatprep.subr.mxu0 0.0
    %498 = vmatpush1.msra.mxu0 0.0
    %499 = vmatprep.subr.mxu0 0.0
    %500 = vmatpush1.msra.mxu0 0.0
    %501 = vmatprep.subr.mxu0 0.0
    %502 = vmatpush1.msra.mxu0 0.0
    %503 = vmatprep.subr.mxu0 0.0
    %504 = vmatpush1.msra.mxu0 0.0
    %505 = vmatprep.subr.mxu0 0.0
    %506 = vmatpush1.msra.mxu0 0.0
    %507 = vmatprep.subr.mxu0 0.0
    %508 = vmatpush1.msra.mxu0 0.0
    %509 = vmatprep.subr.mxu0 0.0
    %510 = vmatpush1.msra.mxu0 0.0
    %511 = vmatprep.subr.mxu0 0.0
    %512 = vmatpush1.msra.mxu0 0.0
    %513 = vmatprep.subr.mxu0 0.0
    %514 = vmatpush1.msra.mxu0 0.0
    %515 = vmatprep.subr.mxu0 0.0
    %516 = vmatpush1.msra.mxu0 0.0
    %517 = vmatprep.subr.mxu0 0.0
    %518 = vmatpush1.msra.mxu0 0.0
    %519 = vmatprep.subr.mxu0 0.0
    %520 = vmatpush1.msra.mxu0 0.0
    %521 = vmatprep.subr.mxu0 0.0
    %522 = vmatpush1.msra.mxu0 0.0
    %523 = vmatprep.subr.mxu0 0.0
    %524 = vmatpush1.msra.mxu0 0.0
    %525 = vmatprep.subr.mxu0 0.0
    %526 = vmatpush1.msra.mxu0 0.0
    %527 = vmatprep.subr.mxu0 0.0
    %528 = vmatpush1.msra.mxu0 0.0
    %529 = vmatprep.subr.mxu0 0.0
    %530 = vmatpush1.msra.mxu0 0.0
    %531 = vmatprep.subr.mxu0 0.0
    %532 = vmatpush1.msra.mxu0 0.0
    %533 = vmatprep.subr.mxu0 0.0
    %534 = vmatpush1.msra.mxu0 0.0
    %535 = vmatprep.subr.mxu0 0.0
    %536 = vmatpush1.msra.mxu0 0.0
    %537 = vmatprep.subr.mxu0 0.0
    %538 = vmatpush1.msra.mxu0 0.0
    %539 = vmatprep.subr.mxu0 0.0
    %540 = vmatpush1.msra.mxu0 0.0
    %541 = vmatprep.mubr.f32.mxu0 0.0
    %542 = vmatmul.mubr.f32.gmra.mrb[0].mxu0 %v475
    %v543 = vpop.f32.mrb[0].mxu0
    %v544 = vadd.f32 0.0, %v543
    %v545 = vpop.f32.mrb[0].mxu0
    %546 = vdwg.mxu0
    %v547 = vadd.f32 %v474, %v544
    %v548 = vxor.u32 %v547, 2147483648
    %v549 = vmul.f32 %v548, 1.442695
    %v550 = vpow.pop %v549
    %v551 = vadd.f32 %v550, 1.0
    %v552 = vrcp.pop %v551
    %v553 = vmul.f32 1.0, %v552
    %v554 = vtanh.pop %v547
    %v555 = vmul.f32 %v553, %v462
    %557 = vrot.lane.b32.xlu0 %v554, 64
    %v558 = vpop.permute.xlu0 %557
    %v560 = vmul.f32 %v553, %v558
    %562 = vrot.lane.b32.xlu0 %v560, 32
    %v563 = vpop.permute.xlu0 %562
    %v565 = vadd.f32 %v555, %v563
    %v566 = vtanh.pop %v565
    %568 = vrot.lane.b32.xlu0 %v566, 64
    %v569 = vpop.permute.xlu0 %568
    %v571 = vmul.f32 %v553, %v569
    %573 = vrot.lane.b32.xlu0 %v571, 32
    %v574 = vpop.permute.xlu0 %573
    %576 = vst.msk [vmem:[#allocation3 + $0x6] sm:$0x3] %vm266, %v574
    %v577 = vld [vmem:[#allocation2 + $0x8] sm:$0x3]
    %v578 = vsel %vm163, %v574, 0
    %580 = vmatprep.subr.mxu0 0.0
    %581 = vmatpush1.msra.mxu0 %v67
    %582 = vmatprep.subr.mxu0 0.0
    %583 = vmatpush1.msra.mxu0 %v68
    %584 = vmatprep.subr.mxu0 0.0
    %585 = vmatpush1.msra.mxu0 %v69
    %586 = vmatprep.subr.mxu0 0.0
    %587 = vmatpush1.msra.mxu0 %v70
    %588 = vmatprep.subr.mxu0 0.0
    %589 = vmatpush1.msra.mxu0 0.0
    %590 = vmatprep.subr.mxu0 0.0
    %591 = vmatpush1.msra.mxu0 0.0
    %592 = vmatprep.subr.mxu0 0.0
    %593 = vmatpush1.msra.mxu0 0.0
    %594 = vmatprep.subr.mxu0 0.0
    %595 = vmatpush1.msra.mxu0 0.0
    %596 = vmatprep.subr.mxu0 0.0
    %597 = vmatpush1.msra.mxu0 0.0
    %598 = vmatprep.subr.mxu0 0.0
    %599 = vmatpush1.msra.mxu0 0.0
    %600 = vmatprep.subr.mxu0 0.0
    %601 = vmatpush1.msra.mxu0 0.0
    %602 = vmatprep.subr.mxu0 0.0
    %603 = vmatpush1.msra.mxu0 0.0
    %604 = vmatprep.subr.mxu0 0.0
    %605 = vmatpush1.msra.mxu0 0.0
    %606 = vmatprep.subr.mxu0 0.0
    %607 = vmatpush1.msra.mxu0 0.0
    %608 = vmatprep.subr.mxu0 0.0
    %609 = vmatpush1.msra.mxu0 0.0
    %610 = vmatprep.subr.mxu0 0.0
    %611 = vmatpush1.msra.mxu0 0.0
    %612 = vmatprep.subr.mxu0 0.0
    %613 = vmatpush1.msra.mxu0 0.0
    %614 = vmatprep.subr.mxu0 0.0
    %615 = vmatpush1.msra.mxu0 0.0
    %616 = vmatprep.subr.mxu0 0.0
    %617 = vmatpush1.msra.mxu0 0.0
    %618 = vmatprep.subr.mxu0 0.0
    %619 = vmatpush1.msra.mxu0 0.0
    %620 = vmatprep.subr.mxu0 0.0
    %621 = vmatpush1.msra.mxu0 0.0
    %622 = vmatprep.subr.mxu0 0.0
    %623 = vmatpush1.msra.mxu0 0.0
    %624 = vmatprep.subr.mxu0 0.0
    %625 = vmatpush1.msra.mxu0 0.0
    %626 = vmatprep.subr.mxu0 0.0
    %627 = vmatpush1.msra.mxu0 0.0
    %628 = vmatprep.subr.mxu0 0.0
    %629 = vmatpush1.msra.mxu0 0.0
    %630 = vmatprep.subr.mxu0 0.0
    %631 = vmatpush1.msra.mxu0 0.0
    %632 = vmatprep.subr.mxu0 0.0
    %633 = vmatpush1.msra.mxu0 0.0
    %634 = vmatprep.subr.mxu0 0.0
    %635 = vmatpush1.msra.mxu0 0.0
    %636 = vmatprep.subr.mxu0 0.0
    %637 = vmatpush1.msra.mxu0 0.0
    %638 = vmatprep.subr.mxu0 0.0
    %639 = vmatpush1.msra.mxu0 0.0
    %640 = vmatprep.subr.mxu0 0.0
    %641 = vmatpush1.msra.mxu0 0.0
    %642 = vmatprep.subr.mxu0 0.0
    %643 = vmatpush1.msra.mxu0 0.0
    %644 = vmatprep.mubr.f32.mxu0 0.0
    %645 = vmatmul.mubr.f32.gmra.mrb[0].mxu0 %v578
    %v646 = vpop.f32.mrb[0].mxu0
    %v647 = vadd.f32 0.0, %v646
    %v648 = vpop.f32.mrb[0].mxu0
    %649 = vdwg.mxu0
    %v650 = vadd.f32 %v577, %v647
    %v651 = vxor.u32 %v650, 2147483648
    %v652 = vmul.f32 %v651, 1.442695
    %v653 = vpow.pop %v652
    %v654 = vadd.f32 %v653, 1.0
    %v655 = vrcp.pop %v654
    %v656 = vmul.f32 1.0, %v655
    %v657 = vtanh.pop %v650
    %v658 = vmul.f32 %v656, %v565
    %660 = vrot.lane.b32.xlu0 %v657, 64
    %v661 = vpop.permute.xlu0 %660
    %v663 = vmul.f32 %v656, %v661
    %665 = vrot.lane.b32.xlu0 %v663, 32
    %v666 = vpop.permute.xlu0 %665
    %v668 = vadd.f32 %v658, %v666
    %v669 = vtanh.pop %v668
    %671 = vrot.lane.b32.xlu0 %v669, 64
    %v672 = vpop.permute.xlu0 %671
    %v674 = vmul.f32 %v656, %v672
    %676 = vrot.lane.b32.xlu0 %v674, 32
    %v677 = vpop.permute.xlu0 %676
    %679 = vst.msk [vmem:[#allocation3 + $0x8] sm:$0x3] %vm266, %v677
    %v680 = vld [vmem:[#allocation2 + $0xa] sm:$0x3]
    %v681 = vsel %vm163, %v677, 0
    %683 = vmatprep.subr.mxu0 0.0
    %684 = vmatpush1.msra.mxu0 %v67
    %685 = vmatprep.subr.mxu0 0.0
    %686 = vmatpush1.msra.mxu0 %v68
    %687 = vmatprep.subr.mxu0 0.0
    %688 = vmatpush1.msra.mxu0 %v69
    %689 = vmatprep.subr.mxu0 0.0
    %690 = vmatpush1.msra.mxu0 %v70
    %691 = vmatprep.subr.mxu0 0.0
    %692 = vmatpush1.msra.mxu0 0.0
    %693 = vmatprep.subr.mxu0 0.0
    %694 = vmatpush1.msra.mxu0 0.0
    %695 = vmatprep.subr.mxu0 0.0
    %696 = vmatpush1.msra.mxu0 0.0
    %697 = vmatprep.subr.mxu0 0.0
    %698 = vmatpush1.msra.mxu0 0.0
    %699 = vmatprep.subr.mxu0 0.0
    %700 = vmatpush1.msra.mxu0 0.0
    %701 = vmatprep.subr.mxu0 0.0
    %702 = vmatpush1.msra.mxu0 0.0
    %703 = vmatprep.subr.mxu0 0.0
    %704 = vmatpush1.msra.mxu0 0.0
    %705 = vmatprep.subr.mxu0 0.0
    %706 = vmatpush1.msra.mxu0 0.0
    %707 = vmatprep.subr.mxu0 0.0
    %708 = vmatpush1.msra.mxu0 0.0
    %709 = vmatprep.subr.mxu0 0.0
    %710 = vmatpush1.msra.mxu0 0.0
    %711 = vmatprep.subr.mxu0 0.0
    %712 = vmatpush1.msra.mxu0 0.0
    %713 = vmatprep.subr.mxu0 0.0
    %714 = vmatpush1.msra.mxu0 0.0
    %715 = vmatprep.subr.mxu0 0.0
    %716 = vmatpush1.msra.mxu0 0.0
    %717 = vmatprep.subr.mxu0 0.0
    %718 = vmatpush1.msra.mxu0 0.0
    %719 = vmatprep.subr.mxu0 0.0
    %720 = vmatpush1.msra.mxu0 0.0
    %721 = vmatprep.subr.mxu0 0.0
    %722 = vmatpush1.msra.mxu0 0.0
    %723 = vmatprep.subr.mxu0 0.0
    %724 = vmatpush1.msra.mxu0 0.0
    %725 = vmatprep.subr.mxu0 0.0
    %726 = vmatpush1.msra.mxu0 0.0
    %727 = vmatprep.subr.mxu0 0.0
    %728 = vmatpush1.msra.mxu0 0.0
    %729 = vmatprep.subr.mxu0 0.0
    %730 = vmatpush1.msra.mxu0 0.0
    %731 = vmatprep.subr.mxu0 0.0
    %732 = vmatpush1.msra.mxu0 0.0
    %733 = vmatprep.subr.mxu0 0.0
    %734 = vmatpush1.msra.mxu0 0.0
    %735 = vmatprep.subr.mxu0 0.0
    %736 = vmatpush1.msra.mxu0 0.0
    %737 = vmatprep.subr.mxu0 0.0
    %738 = vmatpush1.msra.mxu0 0.0
    %739 = vmatprep.subr.mxu0 0.0
    %740 = vmatpush1.msra.mxu0 0.0
    %741 = vmatprep.subr.mxu0 0.0
    %742 = vmatpush1.msra.mxu0 0.0
    %743 = vmatprep.subr.mxu0 0.0
    %744 = vmatpush1.msra.mxu0 0.0
    %745 = vmatprep.subr.mxu0 0.0
    %746 = vmatpush1.msra.mxu0 0.0
    %747 = vmatprep.mubr.f32.mxu0 0.0
    %748 = vmatmul.mubr.f32.gmra.mrb[0].mxu0 %v681
    %v749 = vpop.f32.mrb[0].mxu0
    %v750 = vadd.f32 0.0, %v749
    %v751 = vpop.f32.mrb[0].mxu0
    %752 = vdwg.mxu0
    %v753 = vadd.f32 %v680, %v750
    %v754 = vxor.u32 %v753, 2147483648
    %v755 = vmul.f32 %v754, 1.442695
    %v756 = vpow.pop %v755
    %v757 = vadd.f32 %v756, 1.0
    %v758 = vrcp.pop %v757
    %v759 = vmul.f32 1.0, %v758
    %v760 = vtanh.pop %v753
    %v761 = vmul.f32 %v759, %v668
    %763 = vrot.lane.b32.xlu0 %v760, 64
    %v764 = vpop.permute.xlu0 %763
    %v766 = vmul.f32 %v759, %v764
    %768 = vrot.lane.b32.xlu0 %v766, 32
    %v769 = vpop.permute.xlu0 %768
    %v771 = vadd.f32 %v761, %v769
    %v772 = vtanh.pop %v771
    %774 = vrot.lane.b32.xlu0 %v772, 64
    %v775 = vpop.permute.xlu0 %774
    %v777 = vmul.f32 %v759, %v775
    %779 = vrot.lane.b32.xlu0 %v777, 32
    %v780 = vpop.permute.xlu0 %779
    %782 = vst.msk [vmem:[#allocation3 + $0xa] sm:$0x3] %vm266, %v780
    %v783 = vld [vmem:[#allocation2 + $0xc] sm:$0x3]
    %v784 = vsel %vm163, %v780, 0
    %786 = vmatprep.subr.mxu0 0.0
    %787 = vmatpush1.msra.mxu0 %v67
    %788 = vmatprep.subr.mxu0 0.0
    %789 = vmatpush1.msra.mxu0 %v68
    %790 = vmatprep.subr.mxu0 0.0
    %791 = vmatpush1.msra.mxu0 %v69
    %792 = vmatprep.subr.mxu0 0.0
    %793 = vmatpush1.msra.mxu0 %v70
    %794 = vmatprep.subr.mxu0 0.0
    %795 = vmatpush1.msra.mxu0 0.0
    %796 = vmatprep.subr.mxu0 0.0
    %797 = vmatpush1.msra.mxu0 0.0
    %798 = vmatprep.subr.mxu0 0.0
    %799 = vmatpush1.msra.mxu0 0.0
    %800 = vmatprep.subr.mxu0 0.0
    %801 = vmatpush1.msra.mxu0 0.0
    %802 = vmatprep.subr.mxu0 0.0
    %803 = vmatpush1.msra.mxu0 0.0
    %804 = vmatprep.subr.mxu0 0.0
    %805 = vmatpush1.msra.mxu0 0.0
    %806 = vmatprep.subr.mxu0 0.0
    %807 = vmatpush1.msra.mxu0 0.0
    %808 = vmatprep.subr.mxu0 0.0
    %809 = vmatpush1.msra.mxu0 0.0
    %810 = vmatprep.subr.mxu0 0.0
    %811 = vmatpush1.msra.mxu0 0.0
    %812 = vmatprep.subr.mxu0 0.0
    %813 = vmatpush1.msra.mxu0 0.0
    %814 = vmatprep.subr.mxu0 0.0
    %815 = vmatpush1.msra.mxu0 0.0
    %816 = vmatprep.subr.mxu0 0.0
    %817 = vmatpush1.msra.mxu0 0.0
    %818 = vmatprep.subr.mxu0 0.0
    %819 = vmatpush1.msra.mxu0 0.0
    %820 = vmatprep.subr.mxu0 0.0
    %821 = vmatpush1.msra.mxu0 0.0
    %822 = vmatprep.subr.mxu0 0.0
    %823 = vmatpush1.msra.mxu0 0.0
    %824 = vmatprep.subr.mxu0 0.0
    %825 = vmatpush1.msra.mxu0 0.0
    %826 = vmatprep.subr.mxu0 0.0
    %827 = vmatpush1.msra.mxu0 0.0
    %828 = vmatprep.subr.mxu0 0.0
    %829 = vmatpush1.msra.mxu0 0.0
    %830 = vmatprep.subr.mxu0 0.0
    %831 = vmatpush1.msra.mxu0 0.0
    %832 = vmatprep.subr.mxu0 0.0
    %833 = vmatpush1.msra.mxu0 0.0
    %834 = vmatprep.subr.mxu0 0.0
    %835 = vmatpush1.msra.mxu0 0.0
    %836 = vmatprep.subr.mxu0 0.0
    %837 = vmatpush1.msra.mxu0 0.0
    %838 = vmatprep.subr.mxu0 0.0
    %839 = vmatpush1.msra.mxu0 0.0
    %840 = vmatprep.subr.mxu0 0.0
    %841 = vmatpush1.msra.mxu0 0.0
    %842 = vmatprep.subr.mxu0 0.0
    %843 = vmatpush1.msra.mxu0 0.0
    %844 = vmatprep.subr.mxu0 0.0
    %845 = vmatpush1.msra.mxu0 0.0
    %846 = vmatprep.subr.mxu0 0.0
    %847 = vmatpush1.msra.mxu0 0.0
    %848 = vmatprep.subr.mxu0 0.0
    %849 = vmatpush1.msra.mxu0 0.0
    %850 = vmatprep.mubr.f32.mxu0 0.0
    %851 = vmatmul.mubr.f32.gmra.mrb[0].mxu0 %v784
    %v852 = vpop.f32.mrb[0].mxu0
    %v853 = vadd.f32 0.0, %v852
    %v854 = vpop.f32.mrb[0].mxu0
    %855 = vdwg.mxu0
    %v856 = vadd.f32 %v783, %v853
    %v857 = vxor.u32 %v856, 2147483648
    %v858 = vmul.f32 %v857, 1.442695
    %v859 = vpow.pop %v858
    %v860 = vadd.f32 %v859, 1.0
    %v861 = vrcp.pop %v860
    %v862 = vmul.f32 1.0, %v861
    %v863 = vtanh.pop %v856
    %v864 = vmul.f32 %v862, %v771
    %866 = vrot.lane.b32.xlu0 %v863, 64
    %v867 = vpop.permute.xlu0 %866
    %v869 = vmul.f32 %v862, %v867
    %871 = vrot.lane.b32.xlu0 %v869, 32
    %v872 = vpop.permute.xlu0 %871
    %v874 = vadd.f32 %v864, %v872
    %v875 = vtanh.pop %v874
    %877 = vrot.lane.b32.xlu0 %v875, 64
    %v878 = vpop.permute.xlu0 %877
    %v880 = vmul.f32 %v862, %v878
    %882 = vrot.lane.b32.xlu0 %v880, 32
    %v883 = vpop.permute.xlu0 %882
    %885 = vst.msk [vmem:[#allocation3 + $0xc] sm:$0x3] %vm266, %v883
    %v886 = vld [vmem:[#allocation2 + $0xe] sm:$0x3]
    %v887 = vsel %vm163, %v883, 0
    %889 = vmatprep.subr.mxu0 0.0
    %890 = vmatpush1.msra.mxu0 %v67
    %891 = vmatprep.subr.mxu0 0.0
    %892 = vmatpush1.msra.mxu0 %v68
    %893 = vmatprep.subr.mxu0 0.0
    %894 = vmatpush1.msra.mxu0 %v69
    %895 = vmatprep.subr.mxu0 0.0
    %896 = vmatpush1.msra.mxu0 %v70
    %897 = vmatprep.subr.mxu0 0.0
    %898 = vmatpush1.msra.mxu0 0.0
    %899 = vmatprep.subr.mxu0 0.0
    %900 = vmatpush1.msra.mxu0 0.0
    %901 = vmatprep.subr.mxu0 0.0
    %902 = vmatpush1.msra.mxu0 0.0
    %903 = vmatprep.subr.mxu0 0.0
    %904 = vmatpush1.msra.mxu0 0.0
    %905 = vmatprep.subr.mxu0 0.0
    %906 = vmatpush1.msra.mxu0 0.0
    %907 = vmatprep.subr.mxu0 0.0
    %908 = vmatpush1.msra.mxu0 0.0
    %909 = vmatprep.subr.mxu0 0.0
    %910 = vmatpush1.msra.mxu0 0.0
    %911 = vmatprep.subr.mxu0 0.0
    %912 = vmatpush1.msra.mxu0 0.0
    %913 = vmatprep.subr.mxu0 0.0
    %914 = vmatpush1.msra.mxu0 0.0
    %915 = vmatprep.subr.mxu0 0.0
    %916 = vmatpush1.msra.mxu0 0.0
    %917 = vmatprep.subr.mxu0 0.0
    %918 = vmatpush1.msra.mxu0 0.0
    %919 = vmatprep.subr.mxu0 0.0
    %920 = vmatpush1.msra.mxu0 0.0
    %921 = vmatprep.subr.mxu0 0.0
    %922 = vmatpush1.msra.mxu0 0.0
    %923 = vmatprep.subr.mxu0 0.0
    %924 = vmatpush1.msra.mxu0 0.0
    %925 = vmatprep.subr.mxu0 0.0
    %926 = vmatpush1.msra.mxu0 0.0
    %927 = vmatprep.subr.mxu0 0.0
    %928 = vmatpush1.msra.mxu0 0.0
    %929 = vmatprep.subr.mxu0 0.0
    %930 = vmatpush1.msra.mxu0 0.0
    %931 = vmatprep.subr.mxu0 0.0
    %932 = vmatpush1.msra.mxu0 0.0
    %933 = vmatprep.subr.mxu0 0.0
    %934 = vmatpush1.msra.mxu0 0.0
    %935 = vmatprep.subr.mxu0 0.0
    %936 = vmatpush1.msra.mxu0 0.0
    %937 = vmatprep.subr.mxu0 0.0
    %938 = vmatpush1.msra.mxu0 0.0
    %939 = vmatprep.subr.mxu0 0.0
    %940 = vmatpush1.msra.mxu0 0.0
    %941 = vmatprep.subr.mxu0 0.0
    %942 = vmatpush1.msra.mxu0 0.0
    %943 = vmatprep.subr.mxu0 0.0
    %944 = vmatpush1.msra.mxu0 0.0
    %945 = vmatprep.subr.mxu0 0.0
    %946 = vmatpush1.msra.mxu0 0.0
    %947 = vmatprep.subr.mxu0 0.0
    %948 = vmatpush1.msra.mxu0 0.0
    %949 = vmatprep.subr.mxu0 0.0
    %950 = vmatpush1.msra.mxu0 0.0
    %951 = vmatprep.subr.mxu0 0.0
    %952 = vmatpush1.msra.mxu0 0.0
    %953 = vmatprep.mubr.f32.mxu0 0.0
    %954 = vmatmul.mubr.f32.gmra.mrb[0].mxu0 %v887
    %v955 = vpop.f32.mrb[0].mxu0
    %v956 = vadd.f32 0.0, %v955
    %v957 = vpop.f32.mrb[0].mxu0
    %958 = vdwg.mxu0
    %v959 = vadd.f32 %v886, %v956
    %v960 = vxor.u32 %v959, 2147483648
    %v961 = vmul.f32 %v960, 1.442695
    %v962 = vpow.pop %v961
    %v963 = vadd.f32 %v962, 1.0
    %v964 = vrcp.pop %v963
    %v965 = vmul.f32 1.0, %v964
    %v966 = vtanh.pop %v959
    %v967 = vmul.f32 %v965, %v874
    %969 = vrot.lane.b32.xlu0 %v966, 64
    %v970 = vpop.permute.xlu0 %969
    %v972 = vmul.f32 %v965, %v970
    %974 = vrot.lane.b32.xlu0 %v972, 32
    %v975 = vpop.permute.xlu0 %974
    %v977 = vadd.f32 %v967, %v975
    %v978 = vtanh.pop %v977
    %980 = vrot.lane.b32.xlu0 %v978, 64
    %v981 = vpop.permute.xlu0 %980
    %v983 = vmul.f32 %v965, %v981
    %985 = vrot.lane.b32.xlu0 %v983, 32
    %v986 = vpop.permute.xlu0 %985
    %988 = vst.msk [vmem:[#allocation3 + $0xe] sm:$0x3] %vm266, %v986
    %v989 = vld [vmem:[%s3] sm:$0xff]
    %v990 = vld [vmem:[%s3 + $0x8] sm:$0xff]
    %v991 = vld [vmem:[%s3 + $0x10] sm:$0xff]
    %v992 = vld [vmem:[%s3 + $0x18] sm:$0xff]
    %v993 = vld [vmem:[%s3 + $0x20] sm:$0xff]
    %v994 = vld [vmem:[%s3 + $0x28] sm:$0xff]
    %v995 = vld [vmem:[%s3 + $0x30] sm:$0xff]
    %v996 = vld [vmem:[%s3 + $0x38] sm:$0xff]
    %v997 = vld [vmem:[#allocation7 + $0x1] sm:$0x1]
    %v998 = vld [vmem:[#allocation3] sm:$0xff]
    %v999 = vld [vmem:[#allocation3 + $0x8] sm:$0xff]
    %v1000 = vlaneseq
    %v1001 = vshrl.u32 %v1000, 7
    %v1002 = vsub.s32 0, %v1001
    %v1003 = vrot.slane %v997, %v1002
    %v1005 = vsel %vm163, %v998, 0
    %v1008 = vsel %vm163, %v999, 0
    %1010 = vmatprep.subr.mxu0 0.0
    %1011 = vmatpush1.msra.mxu0 %v989
    %1012 = vmatprep.subr.mxu0 0.0
    %1013 = vmatpush1.msra.mxu0 %v990
    %1014 = vmatprep.subr.mxu0 0.0
    %1015 = vmatpush1.msra.mxu0 %v991
    %1016 = vmatprep.subr.mxu0 0.0
    %1017 = vmatpush1.msra.mxu0 %v992
    %1018 = vmatprep.subr.mxu0 0.0
    %1019 = vmatpush1.msra.mxu0 0.0
    %1020 = vmatprep.subr.mxu0 0.0
    %1021 = vmatpush1.msra.mxu0 0.0
    %1022 = vmatprep.subr.mxu0 0.0
    %1023 = vmatpush1.msra.mxu0 0.0
    %1024 = vmatprep.subr.mxu0 0.0
    %1025 = vmatpush1.msra.mxu0 0.0
    %1026 = vmatprep.subr.mxu0 0.0
    %1027 = vmatpush1.msra.mxu0 0.0
    %1028 = vmatprep.subr.mxu0 0.0
    %1029 = vmatpush1.msra.mxu0 0.0
    %1030 = vmatprep.subr.mxu0 0.0
    %1031 = vmatpush1.msra.mxu0 0.0
    %1032 = vmatprep.subr.mxu0 0.0
    %1033 = vmatpush1.msra.mxu0 0.0
    %1034 = vmatprep.subr.mxu0 0.0
    %1035 = vmatpush1.msra.mxu0 0.0
    %1036 = vmatprep.subr.mxu0 0.0
    %1037 = vmatpush1.msra.mxu0 0.0
    %1038 = vmatprep.subr.mxu0 0.0
    %1039 = vmatpush1.msra.mxu0 0.0
    %1040 = vmatprep.subr.mxu0 0.0
    %1041 = vmatpush1.msra.mxu0 0.0
    %1042 = vmatprep.subr.mxu0 0.0
    %1043 = vmatpush1.msra.mxu0 0.0
    %1044 = vmatprep.subr.mxu0 0.0
    %1045 = vmatpush1.msra.mxu0 0.0
    %1046 = vmatprep.subr.mxu0 0.0
    %1047 = vmatpush1.msra.mxu0 0.0
    %1048 = vmatprep.subr.mxu0 0.0
    %1049 = vmatpush1.msra.mxu0 0.0
    %1050 = vmatprep.subr.mxu0 0.0
    %1051 = vmatpush1.msra.mxu0 0.0
    %1052 = vmatprep.subr.mxu0 0.0
    %1053 = vmatpush1.msra.mxu0 0.0
    %1054 = vmatprep.subr.mxu0 0.0
    %1055 = vmatpush1.msra.mxu0 0.0
    %1056 = vmatprep.subr.mxu0 0.0
    %1057 = vmatpush1.msra.mxu0 0.0
    %1058 = vmatprep.subr.mxu0 0.0
    %1059 = vmatpush1.msra.mxu0 0.0
    %1060 = vmatprep.subr.mxu0 0.0
    %1061 = vmatpush1.msra.mxu0 0.0
    %1062 = vmatprep.subr.mxu0 0.0
    %1063 = vmatpush1.msra.mxu0 0.0
    %1064 = vmatprep.subr.mxu0 0.0
    %1065 = vmatpush1.msra.mxu0 0.0
    %1066 = vmatprep.subr.mxu0 0.0
    %1067 = vmatpush1.msra.mxu0 0.0
    %1068 = vmatprep.subr.mxu0 0.0
    %1069 = vmatpush1.msra.mxu0 0.0
    %1070 = vmatprep.subr.mxu0 0.0
    %1071 = vmatpush1.msra.mxu0 0.0
    %1072 = vmatprep.subr.mxu0 0.0
    %1073 = vmatpush1.msra.mxu0 0.0
    %1074 = vmatprep.mubr.f32.mxu0 0.0
    %1075 = vmatmul.mubr.f32.gmra.mrb[0].mxu0 %v1005
    %v1076 = vpop.f32.mrb[0].mxu0
    %v1077 = vadd.f32 %v1003, %v1076
    %v1078 = vpop.f32.mrb[0].mxu0
    %1079 = vmatprep.mubr.f32.mxu0 0.0
    %1080 = vmatmul.mubr.f32.gmra.mrb[0].mxu0 %v1008
    %v1081 = vpop.f32.mrb[0].mxu0
    %v1082 = vadd.f32 %v1003, %v1081
    %v1083 = vpop.f32.mrb[0].mxu0
    %1084 = vdwg.mxu0
    %1085 = vst [vmem:[#allocation2] sm:$0xff] %v1077
    %1086 = vst [vmem:[#allocation2 + $0x8] sm:$0xff] %v1082
    %v1087 = vld [vmem:[#allocation2] sm:$0x3]
    %1088 = vmatprep.subr.mxu0 0.0
    %1089 = vmatpush1.msra.mxu0 %v993
    %1090 = vmatprep.subr.mxu0 0.0
    %1091 = vmatpush1.msra.mxu0 %v994
    %1092 = vmatprep.subr.mxu0 0.0
    %1093 = vmatpush1.msra.mxu0 %v995
    %1094 = vmatprep.subr.mxu0 0.0
    %1095 = vmatpush1.msra.mxu0 %v996
    %1096 = vmatprep.subr.mxu0 0.0
    %1097 = vmatpush1.msra.mxu0 0.0
    %1098 = vmatprep.subr.mxu0 0.0
    %1099 = vmatpush1.msra.mxu0 0.0
    %1100 = vmatprep.subr.mxu0 0.0
    %1101 = vmatpush1.msra.mxu0 0.0
    %1102 = vmatprep.subr.mxu0 0.0
    %1103 = vmatpush1.msra.mxu0 0.0
    %1104 = vmatprep.subr.mxu0 0.0
    %1105 = vmatpush1.msra.mxu0 0.0
    %1106 = vmatprep.subr.mxu0 0.0
    %1107 = vmatpush1.msra.mxu0 0.0
    %1108 = vmatprep.subr.mxu0 0.0
    %1109 = vmatpush1.msra.mxu0 0.0
    %1110 = vmatprep.subr.mxu0 0.0
    %1111 = vmatpush1.msra.mxu0 0.0
    %1112 = vmatprep.subr.mxu0 0.0
    %1113 = vmatpush1.msra.mxu0 0.0
    %1114 = vmatprep.subr.mxu0 0.0
    %1115 = vmatpush1.msra.mxu0 0.0
    %1116 = vmatprep.subr.mxu0 0.0
    %1117 = vmatpush1.msra.mxu0 0.0
    %1118 = vmatprep.subr.mxu0 0.0
    %1119 = vmatpush1.msra.mxu0 0.0
    %1120 = vmatprep.subr.mxu0 0.0
    %1121 = vmatpush1.msra.mxu0 0.0
    %1122 = vmatprep.subr.mxu0 0.0
    %1123 = vmatpush1.msra.mxu0 0.0
    %1124 = vmatprep.subr.mxu0 0.0
    %1125 = vmatpush1.msra.mxu0 0.0
    %1126 = vmatprep.subr.mxu0 0.0
    %1127 = vmatpush1.msra.mxu0 0.0
    %1128 = vmatprep.subr.mxu0 0.0
    %1129 = vmatpush1.msra.mxu0 0.0
    %1130 = vmatprep.subr.mxu0 0.0
    %1131 = vmatpush1.msra.mxu0 0.0
    %1132 = vmatprep.subr.mxu0 0.0
    %1133 = vmatpush1.msra.mxu0 0.0
    %1134 = vmatprep.subr.mxu0 0.0
    %1135 = vmatpush1.msra.mxu0 0.0
    %1136 = vmatprep.subr.mxu0 0.0
    %1137 = vmatpush1.msra.mxu0 0.0
    %1138 = vmatprep.subr.mxu0 0.0
    %1139 = vmatpush1.msra.mxu0 0.0
    %1140 = vmatprep.subr.mxu0 0.0
    %1141 = vmatpush1.msra.mxu0 0.0
    %1142 = vmatprep.subr.mxu0 0.0
    %1143 = vmatpush1.msra.mxu0 0.0
    %1144 = vmatprep.subr.mxu0 0.0
    %1145 = vmatpush1.msra.mxu0 0.0
    %1146 = vmatprep.subr.mxu0 0.0
    %1147 = vmatpush1.msra.mxu0 0.0
    %1148 = vmatprep.subr.mxu0 0.0
    %1149 = vmatpush1.msra.mxu0 0.0
    %1150 = vmatprep.subr.mxu0 0.0
    %1151 = vmatpush1.msra.mxu0 0.0
    %1152 = vmatprep.mubr.f32.mxu0 0.0
    %1153 = vmatmul.mubr.f32.gmra.mrb[0].mxu0 %v165
    %v1154 = vpop.f32.mrb[0].mxu0
    %v1155 = vadd.f32 0.0, %v1154
    %v1156 = vpop.f32.mrb[0].mxu0
    %1157 = vdwg.mxu0
    %v1158 = vadd.f32 %v1087, %v1155
    %v1159 = vxor.u32 %v1158, 2147483648
    %v1160 = vmul.f32 %v1159, 1.442695
    %v1161 = vpow.pop %v1160
    %v1162 = vadd.f32 %v1161, 1.0
    %v1163 = vrcp.pop %v1162
    %v1164 = vmul.f32 1.0, %v1163
    %v1165 = vtanh.pop %v1158
    %v1166 = vmul.f32 %v1164, 0.0
    %1168 = vrot.lane.b32.xlu0 %v1165, 64
    %v1169 = vpop.permute.xlu0 %1168
    %v1171 = vmul.f32 %v1164, %v1169
    %1173 = vrot.lane.b32.xlu0 %v1171, 32
    %v1174 = vpop.permute.xlu0 %1173
    %v1176 = vadd.f32 %v1166, %v1174
    %v1177 = vtanh.pop %v1176
    %1179 = vrot.lane.b32.xlu0 %v1177, 64
    %v1180 = vpop.permute.xlu0 %1179
    %v1182 = vmul.f32 %v1164, %v1180
    %v1183 = vld [vmem:[#allocation2 + $0x2] sm:$0x3]
    %1185 = vrot.lane.b32.xlu0 %v1182, 32
    %v1186 = vpop.permute.xlu0 %1185
    %v1187 = vsel %vm163, %v1186, 0
    %1189 = vmatprep.subr.mxu0 0.0
    %1190 = vmatpush1.msra.mxu0 %v993
    %1191 = vmatprep.subr.mxu0 0.0
    %1192 = vmatpush1.msra.mxu0 %v994
    %1193 = vmatprep.subr.mxu0 0.0
    %1194 = vmatpush1.msra.mxu0 %v995
    %1195 = vmatprep.subr.mxu0 0.0
    %1196 = vmatpush1.msra.mxu0 %v996
    %1197 = vmatprep.subr.mxu0 0.0
    %1198 = vmatpush1.msra.mxu0 0.0
    %1199 = vmatprep.subr.mxu0 0.0
    %1200 = vmatpush1.msra.mxu0 0.0
    %1201 = vmatprep.subr.mxu0 0.0
    %1202 = vmatpush1.msra.mxu0 0.0
    %1203 = vmatprep.subr.mxu0 0.0
    %1204 = vmatpush1.msra.mxu0 0.0
    %1205 = vmatprep.subr.mxu0 0.0
    %1206 = vmatpush1.msra.mxu0 0.0
    %1207 = vmatprep.subr.mxu0 0.0
    %1208 = vmatpush1.msra.mxu0 0.0
    %1209 = vmatprep.subr.mxu0 0.0
    %1210 = vmatpush1.msra.mxu0 0.0
    %1211 = vmatprep.subr.mxu0 0.0
    %1212 = vmatpush1.msra.mxu0 0.0
    %1213 = vmatprep.subr.mxu0 0.0
    %1214 = vmatpush1.msra.mxu0 0.0
    %1215 = vmatprep.subr.mxu0 0.0
    %1216 = vmatpush1.msra.mxu0 0.0
    %1217 = vmatprep.subr.mxu0 0.0
    %1218 = vmatpush1.msra.mxu0 0.0
    %1219 = vmatprep.subr.mxu0 0.0
    %1220 = vmatpush1.msra.mxu0 0.0
    %1221 = vmatprep.subr.mxu0 0.0
    %1222 = vmatpush1.msra.mxu0 0.0
    %1223 = vmatprep.subr.mxu0 0.0
    %1224 = vmatpush1.msra.mxu0 0.0
    %1225 = vmatprep.subr.mxu0 0.0
    %1226 = vmatpush1.msra.mxu0 0.0
    %1227 = vmatprep.subr.mxu0 0.0
    %1228 = vmatpush1.msra.mxu0 0.0
    %1229 = vmatprep.subr.mxu0 0.0
    %1230 = vmatpush1.msra.mxu0 0.0
    %1231 = vmatprep.subr.mxu0 0.0
    %1232 = vmatpush1.msra.mxu0 0.0
    %1233 = vmatprep.subr.mxu0 0.0
    %1234 = vmatpush1.msra.mxu0 0.0
    %1235 = vmatprep.subr.mxu0 0.0
    %1236 = vmatpush1.msra.mxu0 0.0
    %1237 = vmatprep.subr.mxu0 0.0
    %1238 = vmatpush1.msra.mxu0 0.0
    %1239 = vmatprep.subr.mxu0 0.0
    %1240 = vmatpush1.msra.mxu0 0.0
    %1241 = vmatprep.subr.mxu0 0.0
    %1242 = vmatpush1.msra.mxu0 0.0
    %1243 = vmatprep.subr.mxu0 0.0
    %1244 = vmatpush1.msra.mxu0 0.0
    %1245 = vmatprep.subr.mxu0 0.0
    %1246 = vmatpush1.msra.mxu0 0.0
    %1247 = vmatprep.subr.mxu0 0.0
    %1248 = vmatpush1.msra.mxu0 0.0
    %1249 = vmatprep.subr.mxu0 0.0
    %1250 = vmatpush1.msra.mxu0 0.0
    %1251 = vmatprep.subr.mxu0 0.0
    %1252 = vmatpush1.msra.mxu0 0.0
    %1253 = vmatprep.mubr.f32.mxu0 0.0
    %1254 = vmatmul.mubr.f32.gmra.mrb[0].mxu0 %v1187
    %v1255 = vpop.f32.mrb[0].mxu0
    %v1256 = vadd.f32 0.0, %v1255
    %v1257 = vpop.f32.mrb[0].mxu0
    %1258 = vdwg.mxu0
    %v1259 = vadd.f32 %v1183, %v1256
    %v1260 = vxor.u32 %v1259, 2147483648
    %v1261 = vmul.f32 %v1260, 1.442695
    %v1262 = vpow.pop %v1261
    %v1263 = vadd.f32 %v1262, 1.0
    %v1264 = vrcp.pop %v1263
    %v1265 = vmul.f32 1.0, %v1264
    %v1266 = vtanh.pop %v1259
    %v1267 = vmul.f32 %v1265, %v1176
    %1269 = vrot.lane.b32.xlu0 %v1266, 64
    %v1270 = vpop.permute.xlu0 %1269
    %v1272 = vmul.f32 %v1265, %v1270
    %1274 = vrot.lane.b32.xlu0 %v1272, 32
    %v1275 = vpop.permute.xlu0 %1274
    %v1277 = vadd.f32 %v1267, %v1275
    %v1278 = vtanh.pop %v1277
    %1280 = vrot.lane.b32.xlu0 %v1278, 64
    %v1281 = vpop.permute.xlu0 %1280
    %v1283 = vmul.f32 %v1265, %v1281
    %v1284 = vld [vmem:[#allocation2 + $0x4] sm:$0x3]
    %1286 = vrot.lane.b32.xlu0 %v1283, 32
    %v1287 = vpop.permute.xlu0 %1286
    %v1288 = vsel %vm163, %v1287, 0
    %1290 = vmatprep.subr.mxu0 0.0
    %1291 = vmatpush1.msra.mxu0 %v993
    %1292 = vmatprep.subr.mxu0 0.0
    %1293 = vmatpush1.msra.mxu0 %v994
    %1294 = vmatprep.subr.mxu0 0.0
    %1295 = vmatpush1.msra.mxu0 %v995
    %1296 = vmatprep.subr.mxu0 0.0
    %1297 = vmatpush1.msra.mxu0 %v996
    %1298 = vmatprep.subr.mxu0 0.0
    %1299 = vmatpush1.msra.mxu0 0.0
    %1300 = vmatprep.subr.mxu0 0.0
    %1301 = vmatpush1.msra.mxu0 0.0
    %1302 = vmatprep.subr.mxu0 0.0
    %1303 = vmatpush1.msra.mxu0 0.0
    %1304 = vmatprep.subr.mxu0 0.0
    %1305 = vmatpush1.msra.mxu0 0.0
    %1306 = vmatprep.subr.mxu0 0.0
    %1307 = vmatpush1.msra.mxu0 0.0
    %1308 = vmatprep.subr.mxu0 0.0
    %1309 = vmatpush1.msra.mxu0 0.0
    %1310 = vmatprep.subr.mxu0 0.0
    %1311 = vmatpush1.msra.mxu0 0.0
    %1312 = vmatprep.subr.mxu0 0.0
    %1313 = vmatpush1.msra.mxu0 0.0
    %1314 = vmatprep.subr.mxu0 0.0
    %1315 = vmatpush1.msra.mxu0 0.0
    %1316 = vmatprep.subr.mxu0 0.0
    %1317 = vmatpush1.msra.mxu0 0.0
    %1318 = vmatprep.subr.mxu0 0.0
    %1319 = vmatpush1.msra.mxu0 0.0
    %1320 = vmatprep.subr.mxu0 0.0
    %1321 = vmatpush1.msra.mxu0 0.0
    %1322 = vmatprep.subr.mxu0 0.0
    %1323 = vmatpush1.msra.mxu0 0.0
    %1324 = vmatprep.subr.mxu0 0.0
    %1325 = vmatpush1.msra.mxu0 0.0
    %1326 = vmatprep.subr.mxu0 0.0
    %1327 = vmatpush1.msra.mxu0 0.0
    %1328 = vmatprep.subr.mxu0 0.0
    %1329 = vmatpush1.msra.mxu0 0.0
    %1330 = vmatprep.subr.mxu0 0.0
    %1331 = vmatpush1.msra.mxu0 0.0
    %1332 = vmatprep.subr.mxu0 0.0
    %1333 = vmatpush1.msra.mxu0 0.0
    %1334 = vmatprep.subr.mxu0 0.0
    %1335 = vmatpush1.msra.mxu0 0.0
    %1336 = vmatprep.subr.mxu0 0.0
    %1337 = vmatpush1.msra.mxu0 0.0
    %1338 = vmatprep.subr.mxu0 0.0
    %1339 = vmatpush1.msra.mxu0 0.0
    %1340 = vmatprep.subr.mxu0 0.0
    %1341 = vmatpush1.msra.mxu0 0.0
    %1342 = vmatprep.subr.mxu0 0.0
    %1343 = vmatpush1.msra.mxu0 0.0
    %1344 = vmatprep.subr.mxu0 0.0
    %1345 = vmatpush1.msra.mxu0 0.0
    %1346 = vmatprep.subr.mxu0 0.0
    %1347 = vmatpush1.msra.mxu0 0.0
    %1348 = vmatprep.subr.mxu0 0.0
    %1349 = vmatpush1.msra.mxu0 0.0
    %1350 = vmatprep.subr.mxu0 0.0
    %1351 = vmatpush1.msra.mxu0 0.0
    %1352 = vmatprep.subr.mxu0 0.0
    %1353 = vmatpush1.msra.mxu0 0.0
    %1354 = vmatprep.mubr.f32.mxu0 0.0
    %1355 = vmatmul.mubr.f32.gmra.mrb[0].mxu0 %v1288
    %v1356 = vpop.f32.mrb[0].mxu0
    %v1357 = vadd.f32 0.0, %v1356
    %v1358 = vpop.f32.mrb[0].mxu0
    %1359 = vdwg.mxu0
    %v1360 = vadd.f32 %v1284, %v1357
    %v1361 = vxor.u32 %v1360, 2147483648
    %v1362 = vmul.f32 %v1361, 1.442695
    %v1363 = vpow.pop %v1362
    %v1364 = vadd.f32 %v1363, 1.0
    %v1365 = vrcp.pop %v1364
    %v1366 = vmul.f32 1.0, %v1365
    %v1367 = vtanh.pop %v1360
    %v1368 = vmul.f32 %v1366, %v1277
    %1370 = vrot.lane.b32.xlu0 %v1367, 64
    %v1371 = vpop.permute.xlu0 %1370
    %v1373 = vmul.f32 %v1366, %v1371
    %1375 = vrot.lane.b32.xlu0 %v1373, 32
    %v1376 = vpop.permute.xlu0 %1375
    %v1378 = vadd.f32 %v1368, %v1376
    %v1379 = vtanh.pop %v1378
    %1381 = vrot.lane.b32.xlu0 %v1379, 64
    %v1382 = vpop.permute.xlu0 %1381
    %v1384 = vmul.f32 %v1366, %v1382
    %v1385 = vld [vmem:[#allocation2 + $0x6] sm:$0x3]
    %1387 = vrot.lane.b32.xlu0 %v1384, 32
    %v1388 = vpop.permute.xlu0 %1387
    %v1389 = vsel %vm163, %v1388, 0
    %1391 = vmatprep.subr.mxu0 0.0
    %1392 = vmatpush1.msra.mxu0 %v993
    %1393 = vmatprep.subr.mxu0 0.0
    %1394 = vmatpush1.msra.mxu0 %v994
    %1395 = vmatprep.subr.mxu0 0.0
    %1396 = vmatpush1.msra.mxu0 %v995
    %1397 = vmatprep.subr.mxu0 0.0
    %1398 = vmatpush1.msra.mxu0 %v996
    %1399 = vmatprep.subr.mxu0 0.0
    %1400 = vmatpush1.msra.mxu0 0.0
    %1401 = vmatprep.subr.mxu0 0.0
    %1402 = vmatpush1.msra.mxu0 0.0
    %1403 = vmatprep.subr.mxu0 0.0
    %1404 = vmatpush1.msra.mxu0 0.0
    %1405 = vmatprep.subr.mxu0 0.0
    %1406 = vmatpush1.msra.mxu0 0.0
    %1407 = vmatprep.subr.mxu0 0.0
    %1408 = vmatpush1.msra.mxu0 0.0
    %1409 = vmatprep.subr.mxu0 0.0
    %1410 = vmatpush1.msra.mxu0 0.0
    %1411 = vmatprep.subr.mxu0 0.0
    %1412 = vmatpush1.msra.mxu0 0.0
    %1413 = vmatprep.subr.mxu0 0.0
    %1414 = vmatpush1.msra.mxu0 0.0
    %1415 = vmatprep.subr.mxu0 0.0
    %1416 = vmatpush1.msra.mxu0 0.0
    %1417 = vmatprep.subr.mxu0 0.0
    %1418 = vmatpush1.msra.mxu0 0.0
    %1419 = vmatprep.subr.mxu0 0.0
    %1420 = vmatpush1.msra.mxu0 0.0
    %1421 = vmatprep.subr.mxu0 0.0
    %1422 = vmatpush1.msra.mxu0 0.0
    %1423 = vmatprep.subr.mxu0 0.0
    %1424 = vmatpush1.msra.mxu0 0.0
    %1425 = vmatprep.subr.mxu0 0.0
    %1426 = vmatpush1.msra.mxu0 0.0
    %1427 = vmatprep.subr.mxu0 0.0
    %1428 = vmatpush1.msra.mxu0 0.0
    %1429 = vmatprep.subr.mxu0 0.0
    %1430 = vmatpush1.msra.mxu0 0.0
    %1431 = vmatprep.subr.mxu0 0.0
    %1432 = vmatpush1.msra.mxu0 0.0
    %1433 = vmatprep.subr.mxu0 0.0
    %1434 = vmatpush1.msra.mxu0 0.0
    %1435 = vmatprep.subr.mxu0 0.0
    %1436 = vmatpush1.msra.mxu0 0.0
    %1437 = vmatprep.subr.mxu0 0.0
    %1438 = vmatpush1.msra.mxu0 0.0
    %1439 = vmatprep.subr.mxu0 0.0
    %1440 = vmatpush1.msra.mxu0 0.0
    %1441 = vmatprep.subr.mxu0 0.0
    %1442 = vmatpush1.msra.mxu0 0.0
    %1443 = vmatprep.subr.mxu0 0.0
    %1444 = vmatpush1.msra.mxu0 0.0
    %1445 = vmatprep.subr.mxu0 0.0
    %1446 = vmatpush1.msra.mxu0 0.0
    %1447 = vmatprep.subr.mxu0 0.0
    %1448 = vmatpush1.msra.mxu0 0.0
    %1449 = vmatprep.subr.mxu0 0.0
    %1450 = vmatpush1.msra.mxu0 0.0
    %1451 = vmatprep.subr.mxu0 0.0
    %1452 = vmatpush1.msra.mxu0 0.0
    %1453 = vmatprep.subr.mxu0 0.0
    %1454 = vmatpush1.msra.mxu0 0.0
    %1455 = vmatprep.mubr.f32.mxu0 0.0
    %1456 = vmatmul.mubr.f32.gmra.mrb[0].mxu0 %v1389
    %v1457 = vpop.f32.mrb[0].mxu0
    %v1458 = vadd.f32 0.0, %v1457
    %v1459 = vpop.f32.mrb[0].mxu0
    %1460 = vdwg.mxu0
    %v1461 = vadd.f32 %v1385, %v1458
    %v1462 = vxor.u32 %v1461, 2147483648
    %v1463 = vmul.f32 %v1462, 1.442695
    %v1464 = vpow.pop %v1463
    %v1465 = vadd.f32 %v1464, 1.0
    %v1466 = vrcp.pop %v1465
    %v1467 = vmul.f32 1.0, %v1466
    %v1468 = vtanh.pop %v1461
    %v1469 = vmul.f32 %v1467, %v1378
    %1471 = vrot.lane.b32.xlu0 %v1468, 64
    %v1472 = vpop.permute.xlu0 %1471
    %v1474 = vmul.f32 %v1467, %v1472
    %1476 = vrot.lane.b32.xlu0 %v1474, 32
    %v1477 = vpop.permute.xlu0 %1476
    %v1479 = vadd.f32 %v1469, %v1477
    %v1480 = vtanh.pop %v1479
    %1482 = vrot.lane.b32.xlu0 %v1480, 64
    %v1483 = vpop.permute.xlu0 %1482
    %v1485 = vmul.f32 %v1467, %v1483
    %v1486 = vld [vmem:[#allocation2 + $0x8] sm:$0x3]
    %1488 = vrot.lane.b32.xlu0 %v1485, 32
    %v1489 = vpop.permute.xlu0 %1488
    %v1490 = vsel %vm163, %v1489, 0
    %1492 = vmatprep.subr.mxu0 0.0
    %1493 = vmatpush1.msra.mxu0 %v993
    %1494 = vmatprep.subr.mxu0 0.0
    %1495 = vmatpush1.msra.mxu0 %v994
    %1496 = vmatprep.subr.mxu0 0.0
    %1497 = vmatpush1.msra.mxu0 %v995
    %1498 = vmatprep.subr.mxu0 0.0
    %1499 = vmatpush1.msra.mxu0 %v996
    %1500 = vmatprep.subr.mxu0 0.0
    %1501 = vmatpush1.msra.mxu0 0.0
    %1502 = vmatprep.subr.mxu0 0.0
    %1503 = vmatpush1.msra.mxu0 0.0
    %1504 = vmatprep.subr.mxu0 0.0
    %1505 = vmatpush1.msra.mxu0 0.0
    %1506 = vmatprep.subr.mxu0 0.0
    %1507 = vmatpush1.msra.mxu0 0.0
    %1508 = vmatprep.subr.mxu0 0.0
    %1509 = vmatpush1.msra.mxu0 0.0
    %1510 = vmatprep.subr.mxu0 0.0
    %1511 = vmatpush1.msra.mxu0 0.0
    %1512 = vmatprep.subr.mxu0 0.0
    %1513 = vmatpush1.msra.mxu0 0.0
    %1514 = vmatprep.subr.mxu0 0.0
    %1515 = vmatpush1.msra.mxu0 0.0
    %1516 = vmatprep.subr.mxu0 0.0
    %1517 = vmatpush1.msra.mxu0 0.0
    %1518 = vmatprep.subr.mxu0 0.0
    %1519 = vmatpush1.msra.mxu0 0.0
    %1520 = vmatprep.subr.mxu0 0.0
    %1521 = vmatpush1.msra.mxu0 0.0
    %1522 = vmatprep.subr.mxu0 0.0
    %1523 = vmatpush1.msra.mxu0 0.0
    %1524 = vmatprep.subr.mxu0 0.0
    %1525 = vmatpush1.msra.mxu0 0.0
    %1526 = vmatprep.subr.mxu0 0.0
    %1527 = vmatpush1.msra.mxu0 0.0
    %1528 = vmatprep.subr.mxu0 0.0
    %1529 = vmatpush1.msra.mxu0 0.0
    %1530 = vmatprep.subr.mxu0 0.0
    %1531 = vmatpush1.msra.mxu0 0.0
    %1532 = vmatprep.subr.mxu0 0.0
    %1533 = vmatpush1.msra.mxu0 0.0
    %1534 = vmatprep.subr.mxu0 0.0
    %1535 = vmatpush1.msra.mxu0 0.0
    %1536 = vmatprep.subr.mxu0 0.0
    %1537 = vmatpush1.msra.mxu0 0.0
    %1538 = vmatprep.subr.mxu0 0.0
    %1539 = vmatpush1.msra.mxu0 0.0
    %1540 = vmatprep.subr.mxu0 0.0
    %1541 = vmatpush1.msra.mxu0 0.0
    %1542 = vmatprep.subr.mxu0 0.0
    %1543 = vmatpush1.msra.mxu0 0.0
    %1544 = vmatprep.subr.mxu0 0.0
    %1545 = vmatpush1.msra.mxu0 0.0
    %1546 = vmatprep.subr.mxu0 0.0
    %1547 = vmatpush1.msra.mxu0 0.0
    %1548 = vmatprep.subr.mxu0 0.0
    %1549 = vmatpush1.msra.mxu0 0.0
    %1550 = vmatprep.subr.mxu0 0.0
    %1551 = vmatpush1.msra.mxu0 0.0
    %1552 = vmatprep.subr.mxu0 0.0
    %1553 = vmatpush1.msra.mxu0 0.0
    %1554 = vmatprep.subr.mxu0 0.0
    %1555 = vmatpush1.msra.mxu0 0.0
    %1556 = vmatprep.mubr.f32.mxu0 0.0
    %1557 = vmatmul.mubr.f32.gmra.mrb[0].mxu0 %v1490
    %v1558 = vpop.f32.mrb[0].mxu0
    %v1559 = vadd.f32 0.0, %v1558
    %v1560 = vpop.f32.mrb[0].mxu0
    %1561 = vdwg.mxu0
    %v1562 = vadd.f32 %v1486, %v1559
    %v1563 = vxor.u32 %v1562, 2147483648
    %v1564 = vmul.f32 %v1563, 1.442695
    %v1565 = vpow.pop %v1564
    %v1566 = vadd.f32 %v1565, 1.0
    %v1567 = vrcp.pop %v1566
    %v1568 = vmul.f32 1.0, %v1567
    %v1569 = vtanh.pop %v1562
    %v1570 = vmul.f32 %v1568, %v1479
    %1572 = vrot.lane.b32.xlu0 %v1569, 64
    %v1573 = vpop.permute.xlu0 %1572
    %v1575 = vmul.f32 %v1568, %v1573
    %1577 = vrot.lane.b32.xlu0 %v1575, 32
    %v1578 = vpop.permute.xlu0 %1577
    %v1580 = vadd.f32 %v1570, %v1578
    %v1581 = vtanh.pop %v1580
    %1583 = vrot.lane.b32.xlu0 %v1581, 64
    %v1584 = vpop.permute.xlu0 %1583
    %v1586 = vmul.f32 %v1568, %v1584
    %v1587 = vld [vmem:[#allocation2 + $0xa] sm:$0x3]
    %1589 = vrot.lane.b32.xlu0 %v1586, 32
    %v1590 = vpop.permute.xlu0 %1589
    %v1591 = vsel %vm163, %v1590, 0
    %1593 = vmatprep.subr.mxu0 0.0
    %1594 = vmatpush1.msra.mxu0 %v993
    %1595 = vmatprep.subr.mxu0 0.0
    %1596 = vmatpush1.msra.mxu0 %v994
    %1597 = vmatprep.subr.mxu0 0.0
    %1598 = vmatpush1.msra.mxu0 %v995
    %1599 = vmatprep.subr.mxu0 0.0
    %1600 = vmatpush1.msra.mxu0 %v996
    %1601 = vmatprep.subr.mxu0 0.0
    %1602 = vmatpush1.msra.mxu0 0.0
    %1603 = vmatprep.subr.mxu0 0.0
    %1604 = vmatpush1.msra.mxu0 0.0
    %1605 = vmatprep.subr.mxu0 0.0
    %1606 = vmatpush1.msra.mxu0 0.0
    %1607 = vmatprep.subr.mxu0 0.0
    %1608 = vmatpush1.msra.mxu0 0.0
    %1609 = vmatprep.subr.mxu0 0.0
    %1610 = vmatpush1.msra.mxu0 0.0
    %1611 = vmatprep.subr.mxu0 0.0
    %1612 = vmatpush1.msra.mxu0 0.0
    %1613 = vmatprep.subr.mxu0 0.0
    %1614 = vmatpush1.msra.mxu0 0.0
    %1615 = vmatprep.subr.mxu0 0.0
    %1616 = vmatpush1.msra.mxu0 0.0
    %1617 = vmatprep.subr.mxu0 0.0
    %1618 = vmatpush1.msra.mxu0 0.0
    %1619 = vmatprep.subr.mxu0 0.0
    %1620 = vmatpush1.msra.mxu0 0.0
    %1621 = vmatprep.subr.mxu0 0.0
    %1622 = vmatpush1.msra.mxu0 0.0
    %1623 = vmatprep.subr.mxu0 0.0
    %1624 = vmatpush1.msra.mxu0 0.0
    %1625 = vmatprep.subr.mxu0 0.0
    %1626 = vmatpush1.msra.mxu0 0.0
    %1627 = vmatprep.subr.mxu0 0.0
    %1628 = vmatpush1.msra.mxu0 0.0
    %1629 = vmatprep.subr.mxu0 0.0
    %1630 = vmatpush1.msra.mxu0 0.0
    %1631 = vmatprep.subr.mxu0 0.0
    %1632 = vmatpush1.msra.mxu0 0.0
    %1633 = vmatprep.subr.mxu0 0.0
    %1634 = vmatpush1.msra.mxu0 0.0
    %1635 = vmatprep.subr.mxu0 0.0
    %1636 = vmatpush1.msra.mxu0 0.0
    %1637 = vmatprep.subr.mxu0 0.0
    %1638 = vmatpush1.msra.mxu0 0.0
    %1639 = vmatprep.subr.mxu0 0.0
    %1640 = vmatpush1.msra.mxu0 0.0
    %1641 = vmatprep.subr.mxu0 0.0
    %1642 = vmatpush1.msra.mxu0 0.0
    %1643 = vmatprep.subr.mxu0 0.0
    %1644 = vmatpush1.msra.mxu0 0.0
    %1645 = vmatprep.subr.mxu0 0.0
    %1646 = vmatpush1.msra.mxu0 0.0
    %1647 = vmatprep.subr.mxu0 0.0
    %1648 = vmatpush1.msra.mxu0 0.0
    %1649 = vmatprep.subr.mxu0 0.0
    %1650 = vmatpush1.msra.mxu0 0.0
    %1651 = vmatprep.subr.mxu0 0.0
    %1652 = vmatpush1.msra.mxu0 0.0
    %1653 = vmatprep.subr.mxu0 0.0
    %1654 = vmatpush1.msra.mxu0 0.0
    %1655 = vmatprep.subr.mxu0 0.0
    %1656 = vmatpush1.msra.mxu0 0.0
    %1657 = vmatprep.mubr.f32.mxu0 0.0
    %1658 = vmatmul.mubr.f32.gmra.mrb[0].mxu0 %v1591
    %v1659 = vpop.f32.mrb[0].mxu0
    %v1660 = vadd.f32 0.0, %v1659
    %v1661 = vpop.f32.mrb[0].mxu0
    %1662 = vdwg.mxu0
    %v1663 = vadd.f32 %v1587, %v1660
    %v1664 = vxor.u32 %v1663, 2147483648
    %v1665 = vmul.f32 %v1664, 1.442695
    %v1666 = vpow.pop %v1665
    %v1667 = vadd.f32 %v1666, 1.0
    %v1668 = vrcp.pop %v1667
    %v1669 = vmul.f32 1.0, %v1668
    %v1670 = vtanh.pop %v1663
    %v1671 = vmul.f32 %v1669, %v1580
    %1673 = vrot.lane.b32.xlu0 %v1670, 64
    %v1674 = vpop.permute.xlu0 %1673
    %v1676 = vmul.f32 %v1669, %v1674
    %1678 = vrot.lane.b32.xlu0 %v1676, 32
    %v1679 = vpop.permute.xlu0 %1678
    %v1681 = vadd.f32 %v1671, %v1679
    %v1682 = vtanh.pop %v1681
    %1684 = vrot.lane.b32.xlu0 %v1682, 64
    %v1685 = vpop.permute.xlu0 %1684
    %v1687 = vmul.f32 %v1669, %v1685
    %v1688 = vld [vmem:[#allocation2 + $0xc] sm:$0x3]
    %1690 = vrot.lane.b32.xlu0 %v1687, 32
    %v1691 = vpop.permute.xlu0 %1690
    %v1692 = vsel %vm163, %v1691, 0
    %1694 = vmatprep.subr.mxu0 0.0
    %1695 = vmatpush1.msra.mxu0 %v993
    %1696 = vmatprep.subr.mxu0 0.0
    %1697 = vmatpush1.msra.mxu0 %v994
    %1698 = vmatprep.subr.mxu0 0.0
    %1699 = vmatpush1.msra.mxu0 %v995
    %1700 = vmatprep.subr.mxu0 0.0
    %1701 = vmatpush1.msra.mxu0 %v996
    %1702 = vmatprep.subr.mxu0 0.0
    %1703 = vmatpush1.msra.mxu0 0.0
    %1704 = vmatprep.subr.mxu0 0.0
    %1705 = vmatpush1.msra.mxu0 0.0
    %1706 = vmatprep.subr.mxu0 0.0
    %1707 = vmatpush1.msra.mxu0 0.0
    %1708 = vmatprep.subr.mxu0 0.0
    %1709 = vmatpush1.msra.mxu0 0.0
    %1710 = vmatprep.subr.mxu0 0.0
    %1711 = vmatpush1.msra.mxu0 0.0
    %1712 = vmatprep.subr.mxu0 0.0
    %1713 = vmatpush1.msra.mxu0 0.0
    %1714 = vmatprep.subr.mxu0 0.0
    %1715 = vmatpush1.msra.mxu0 0.0
    %1716 = vmatprep.subr.mxu0 0.0
    %1717 = vmatpush1.msra.mxu0 0.0
    %1718 = vmatprep.subr.mxu0 0.0
    %1719 = vmatpush1.msra.mxu0 0.0
    %1720 = vmatprep.subr.mxu0 0.0
    %1721 = vmatpush1.msra.mxu0 0.0
    %1722 = vmatprep.subr.mxu0 0.0
    %1723 = vmatpush1.msra.mxu0 0.0
    %1724 = vmatprep.subr.mxu0 0.0
    %1725 = vmatpush1.msra.mxu0 0.0
    %1726 = vmatprep.subr.mxu0 0.0
    %1727 = vmatpush1.msra.mxu0 0.0
    %1728 = vmatprep.subr.mxu0 0.0
    %1729 = vmatpush1.msra.mxu0 0.0
    %1730 = vmatprep.subr.mxu0 0.0
    %1731 = vmatpush1.msra.mxu0 0.0
    %1732 = vmatprep.subr.mxu0 0.0
    %1733 = vmatpush1.msra.mxu0 0.0
    %1734 = vmatprep.subr.mxu0 0.0
    %1735 = vmatpush1.msra.mxu0 0.0
    %1736 = vmatprep.subr.mxu0 0.0
    %1737 = vmatpush1.msra.mxu0 0.0
    %1738 = vmatprep.subr.mxu0 0.0
    %1739 = vmatpush1.msra.mxu0 0.0
    %1740 = vmatprep.subr.mxu0 0.0
    %1741 = vmatpush1.msra.mxu0 0.0
    %1742 = vmatprep.subr.mxu0 0.0
    %1743 = vmatpush1.msra.mxu0 0.0
    %1744 = vmatprep.subr.mxu0 0.0
    %1745 = vmatpush1.msra.mxu0 0.0
    %1746 = vmatprep.subr.mxu0 0.0
    %1747 = vmatpush1.msra.mxu0 0.0
    %1748 = vmatprep.subr.mxu0 0.0
    %1749 = vmatpush1.msra.mxu0 0.0
    %1750 = vmatprep.subr.mxu0 0.0
    %1751 = vmatpush1.msra.mxu0 0.0
    %1752 = vmatprep.subr.mxu0 0.0
    %1753 = vmatpush1.msra.mxu0 0.0
    %1754 = vmatprep.subr.mxu0 0.0
    %1755 = vmatpush1.msra.mxu0 0.0
    %1756 = vmatprep.subr.mxu0 0.0
    %1757 = vmatpush1.msra.mxu0 0.0
    %1758 = vmatprep.mubr.f32.mxu0 0.0
    %1759 = vmatmul.mubr.f32.gmra.mrb[0].mxu0 %v1692
    %v1760 = vpop.f32.mrb[0].mxu0
    %v1761 = vadd.f32 0.0, %v1760
    %v1762 = vpop.f32.mrb[0].mxu0
    %1763 = vdwg.mxu0
    %v1764 = vadd.f32 %v1688, %v1761
    %v1765 = vxor.u32 %v1764, 2147483648
    %v1766 = vmul.f32 %v1765, 1.442695
    %v1767 = vpow.pop %v1766
    %v1768 = vadd.f32 %v1767, 1.0
    %v1769 = vrcp.pop %v1768
    %v1770 = vmul.f32 1.0, %v1769
    %v1771 = vtanh.pop %v1764
    %v1772 = vmul.f32 %v1770, %v1681
    %1774 = vrot.lane.b32.xlu0 %v1771, 64
    %v1775 = vpop.permute.xlu0 %1774
    %v1777 = vmul.f32 %v1770, %v1775
    %1779 = vrot.lane.b32.xlu0 %v1777, 32
    %v1780 = vpop.permute.xlu0 %1779
    %v1782 = vadd.f32 %v1772, %v1780
    %v1783 = vtanh.pop %v1782
    %1785 = vrot.lane.b32.xlu0 %v1783, 64
    %v1786 = vpop.permute.xlu0 %1785
    %v1788 = vmul.f32 %v1770, %v1786
    %v1789 = vld [vmem:[#allocation2 + $0xe] sm:$0x3]
    %1791 = vrot.lane.b32.xlu0 %v1788, 32
    %v1792 = vpop.permute.xlu0 %1791
    %v1793 = vsel %vm163, %v1792, 0
    %1795 = vmatprep.subr.mxu0 0.0
    %1796 = vmatpush1.msra.mxu0 %v993
    %1797 = vmatprep.subr.mxu0 0.0
    %1798 = vmatpush1.msra.mxu0 %v994
    %1799 = vmatprep.subr.mxu0 0.0
    %1800 = vmatpush1.msra.mxu0 %v995
    %1801 = vmatprep.subr.mxu0 0.0
    %1802 = vmatpush1.msra.mxu0 %v996
    %1803 = vmatprep.subr.mxu0 0.0
    %1804 = vmatpush1.msra.mxu0 0.0
    %1805 = vmatprep.subr.mxu0 0.0
    %1806 = vmatpush1.msra.mxu0 0.0
    %1807 = vmatprep.subr.mxu0 0.0
    %1808 = vmatpush1.msra.mxu0 0.0
    %1809 = vmatprep.subr.mxu0 0.0
    %1810 = vmatpush1.msra.mxu0 0.0
    %1811 = vmatprep.subr.mxu0 0.0
    %1812 = vmatpush1.msra.mxu0 0.0
    %1813 = vmatprep.subr.mxu0 0.0
    %1814 = vmatpush1.msra.mxu0 0.0
    %1815 = vmatprep.subr.mxu0 0.0
    %1816 = vmatpush1.msra.mxu0 0.0
    %1817 = vmatprep.subr.mxu0 0.0
    %1818 = vmatpush1.msra.mxu0 0.0
    %1819 = vmatprep.subr.mxu0 0.0
    %1820 = vmatpush1.msra.mxu0 0.0
    %1821 = vmatprep.subr.mxu0 0.0
    %1822 = vmatpush1.msra.mxu0 0.0
    %1823 = vmatprep.subr.mxu0 0.0
    %1824 = vmatpush1.msra.mxu0 0.0
    %1825 = vmatprep.subr.mxu0 0.0
    %1826 = vmatpush1.msra.mxu0 0.0
    %1827 = vmatprep.subr.mxu0 0.0
    %1828 = vmatpush1.msra.mxu0 0.0
    %1829 = vmatprep.subr.mxu0 0.0
    %1830 = vmatpush1.msra.mxu0 0.0
    %1831 = vmatprep.subr.mxu0 0.0
    %1832 = vmatpush1.msra.mxu0 0.0
    %1833 = vmatprep.subr.mxu0 0.0
    %1834 = vmatpush1.msra.mxu0 0.0
    %1835 = vmatprep.subr.mxu0 0.0
    %1836 = vmatpush1.msra.mxu0 0.0
    %1837 = vmatprep.subr.mxu0 0.0
    %1838 = vmatpush1.msra.mxu0 0.0
    %1839 = vmatprep.subr.mxu0 0.0
    %1840 = vmatpush1.msra.mxu0 0.0
    %1841 = vmatprep.subr.mxu0 0.0
    %1842 = vmatpush1.msra.mxu0 0.0
    %1843 = vmatprep.subr.mxu0 0.0
    %1844 = vmatpush1.msra.mxu0 0.0
    %1845 = vmatprep.subr.mxu0 0.0
    %1846 = vmatpush1.msra.mxu0 0.0
    %1847 = vmatprep.subr.mxu0 0.0
    %1848 = vmatpush1.msra.mxu0 0.0
    %1849 = vmatprep.subr.mxu0 0.0
    %1850 = vmatpush1.msra.mxu0 0.0
    %1851 = vmatprep.subr.mxu0 0.0
    %1852 = vmatpush1.msra.mxu0 0.0
    %1853 = vmatprep.subr.mxu0 0.0
    %1854 = vmatpush1.msra.mxu0 0.0
    %1855 = vmatprep.subr.mxu0 0.0
    %1856 = vmatpush1.msra.mxu0 0.0
    %1857 = vmatprep.subr.mxu0 0.0
    %1858 = vmatpush1.msra.mxu0 0.0
    %1859 = vmatprep.mubr.f32.mxu0 0.0
    %1860 = vmatmul.mubr.f32.gmra.mrb[0].mxu0 %v1793
    %v1861 = vpop.f32.mrb[0].mxu0
    %v1862 = vadd.f32 0.0, %v1861
    %v1863 = vpop.f32.mrb[0].mxu0
    %1864 = vdwg.mxu0
    %v1865 = vadd.f32 %v1789, %v1862
    %v1866 = vxor.u32 %v1865, 2147483648
    %v1867 = vmul.f32 %v1866, 1.442695
    %v1868 = vpow.pop %v1867
    %v1869 = vadd.f32 %v1868, 1.0
    %v1870 = vrcp.pop %v1869
    %v1871 = vmul.f32 1.0, %v1870
    %v1872 = vtanh.pop %v1865
    %v1873 = vmul.f32 %v1871, %v1782
    %1875 = vrot.lane.b32.xlu0 %v1872, 64
    %v1876 = vpop.permute.xlu0 %1875
    %v1878 = vmul.f32 %v1871, %v1876
    %1880 = vrot.lane.b32.xlu0 %v1878, 32
    %v1881 = vpop.permute.xlu0 %1880
    %v1883 = vadd.f32 %v1873, %v1881
    %v1884 = vtanh.pop %v1883
    %1886 = vrot.lane.b32.xlu0 %v1884, 64
    %v1887 = vpop.permute.xlu0 %1886
    %v1889 = vmul.f32 %v1871, %v1887
    %v1890 = vld [vmem:[%s1] sm:$0x3]
    %v1891 = vld [vmem:[%s5] sm:$0xff]
    %v1892 = vld [vmem:[%s6] sm:$0x1]
    %v1893 = vlaneseq
    %v1894 = vshrl.u32 %v1893, 7
    %v1895 = vsub.s32 0, %v1894
    %v1896 = vrot.slane %v1892, %v1895
    %vm1897 = vcmask 64512
    %v1899 = vsel %vm1897, %v1890, 0
    %1901 = vmatprep.subr.mxu0 0.0
    %1902 = vmatpush1.msra.mxu0 %v1891
    %1903 = vmatprep.subr.mxu0 0.0
    %1904 = vmatpush1.msra.mxu0 0.0
    %1905 = vmatprep.subr.mxu0 0.0
    %1906 = vmatpush1.msra.mxu0 0.0
    %1907 = vmatprep.subr.mxu0 0.0
    %1908 = vmatpush1.msra.mxu0 0.0
    %1909 = vmatprep.subr.mxu0 0.0
    %1910 = vmatpush1.msra.mxu0 0.0
    %1911 = vmatprep.subr.mxu0 0.0
    %1912 = vmatpush1.msra.mxu0 0.0
    %1913 = vmatprep.subr.mxu0 0.0
    %1914 = vmatpush1.msra.mxu0 0.0
    %1915 = vmatprep.subr.mxu0 0.0
    %1916 = vmatpush1.msra.mxu0 0.0
    %1917 = vmatprep.subr.mxu0 0.0
    %1918 = vmatpush1.msra.mxu0 0.0
    %1919 = vmatprep.subr.mxu0 0.0
    %1920 = vmatpush1.msra.mxu0 0.0
    %1921 = vmatprep.subr.mxu0 0.0
    %1922 = vmatpush1.msra.mxu0 0.0
    %1923 = vmatprep.subr.mxu0 0.0
    %1924 = vmatpush1.msra.mxu0 0.0
    %1925 = vmatprep.subr.mxu0 0.0
    %1926 = vmatpush1.msra.mxu0 0.0
    %1927 = vmatprep.subr.mxu0 0.0
    %1928 = vmatpush1.msra.mxu0 0.0
    %1929 = vmatprep.subr.mxu0 0.0
    %1930 = vmatpush1.msra.mxu0 0.0
    %1931 = vmatprep.subr.mxu0 0.0
    %1932 = vmatpush1.msra.mxu0 0.0
    %1933 = vmatprep.subr.mxu0 0.0
    %1934 = vmatpush1.msra.mxu0 0.0
    %1935 = vmatprep.subr.mxu0 0.0
    %1936 = vmatpush1.msra.mxu0 0.0
    %1937 = vmatprep.subr.mxu0 0.0
    %1938 = vmatpush1.msra.mxu0 0.0
    %1939 = vmatprep.subr.mxu0 0.0
    %1940 = vmatpush1.msra.mxu0 0.0
    %1941 = vmatprep.subr.mxu0 0.0
    %1942 = vmatpush1.msra.mxu0 0.0
    %1943 = vmatprep.subr.mxu0 0.0
    %1944 = vmatpush1.msra.mxu0 0.0
    %1945 = vmatprep.subr.mxu0 0.0
    %1946 = vmatpush1.msra.mxu0 0.0
    %1947 = vmatprep.subr.mxu0 0.0
    %1948 = vmatpush1.msra.mxu0 0.0
    %1949 = vmatprep.subr.mxu0 0.0
    %1950 = vmatpush1.msra.mxu0 0.0
    %1951 = vmatprep.subr.mxu0 0.0
    %1952 = vmatpush1.msra.mxu0 0.0
    %1953 = vmatprep.subr.mxu0 0.0
    %1954 = vmatpush1.msra.mxu0 0.0
    %1955 = vmatprep.subr.mxu0 0.0
    %1956 = vmatpush1.msra.mxu0 0.0
    %1957 = vmatprep.subr.mxu0 0.0
    %1958 = vmatpush1.msra.mxu0 0.0
    %1959 = vmatprep.subr.mxu0 0.0
    %1960 = vmatpush1.msra.mxu0 0.0
    %1961 = vmatprep.subr.mxu0 0.0
    %1962 = vmatpush1.msra.mxu0 0.0
    %1963 = vmatprep.subr.mxu0 0.0
    %1964 = vmatpush1.msra.mxu0 0.0
    %1965 = vmatprep.mubr.f32.mxu0 0.0
    %1966 = vmatmul.mubr.f32.gmra.mrb[0].mxu0 %v1899
    %v1967 = vpop.f32.mrb[0].mxu0
    %v1968 = vadd.f32 %v1896, %v1967
    %v1969 = vpop.f32.mrb[0].mxu0
    %1970 = vdwg.mxu0
    %v1971 = vmax.f32 %v1968, 0.0
    %v1972 = vld [vmem:[%s5 + $0x8] sm:$0xff]
    %v1973 = vld [vmem:[%s6 + $0x1] sm:$0x1]
    %v1974 = vlaneseq
    %v1975 = vshrl.u32 %v1974, 7
    %v1976 = vsub.s32 0, %v1975
    %v1977 = vrot.slane %v1973, %v1976
    %v1979 = vsel %vm1897, %v1971, 0
    %1981 = vmatprep.subr.mxu0 0.0
    %1982 = vmatpush1.msra.mxu0 %v1972
    %1983 = vmatprep.subr.mxu0 0.0
    %1984 = vmatpush1.msra.mxu0 0.0
    %1985 = vmatprep.subr.mxu0 0.0
    %1986 = vmatpush1.msra.mxu0 0.0
    %1987 = vmatprep.subr.mxu0 0.0
    %1988 = vmatpush1.msra.mxu0 0.0
    %1989 = vmatprep.subr.mxu0 0.0
    %1990 = vmatpush1.msra.mxu0 0.0
    %1991 = vmatprep.subr.mxu0 0.0
    %1992 = vmatpush1.msra.mxu0 0.0
    %1993 = vmatprep.subr.mxu0 0.0
    %1994 = vmatpush1.msra.mxu0 0.0
    %1995 = vmatprep.subr.mxu0 0.0
    %1996 = vmatpush1.msra.mxu0 0.0
    %1997 = vmatprep.subr.mxu0 0.0
    %1998 = vmatpush1.msra.mxu0 0.0
    %1999 = vmatprep.subr.mxu0 0.0
    %2000 = vmatpush1.msra.mxu0 0.0
    %2001 = vmatprep.subr.mxu0 0.0
    %2002 = vmatpush1.msra.mxu0 0.0
    %2003 = vmatprep.subr.mxu0 0.0
    %2004 = vmatpush1.msra.mxu0 0.0
    %2005 = vmatprep.subr.mxu0 0.0
    %2006 = vmatpush1.msra.mxu0 0.0
    %2007 = vmatprep.subr.mxu0 0.0
    %2008 = vmatpush1.msra.mxu0 0.0
    %2009 = vmatprep.subr.mxu0 0.0
    %2010 = vmatpush1.msra.mxu0 0.0
    %2011 = vmatprep.subr.mxu0 0.0
    %2012 = vmatpush1.msra.mxu0 0.0
    %2013 = vmatprep.subr.mxu0 0.0
    %2014 = vmatpush1.msra.mxu0 0.0
    %2015 = vmatprep.subr.mxu0 0.0
    %2016 = vmatpush1.msra.mxu0 0.0
    %2017 = vmatprep.subr.mxu0 0.0
    %2018 = vmatpush1.msra.mxu0 0.0
    %2019 = vmatprep.subr.mxu0 0.0
    %2020 = vmatpush1.msra.mxu0 0.0
    %2021 = vmatprep.subr.mxu0 0.0
    %2022 = vmatpush1.msra.mxu0 0.0
    %2023 = vmatprep.subr.mxu0 0.0
    %2024 = vmatpush1.msra.mxu0 0.0
    %2025 = vmatprep.subr.mxu0 0.0
    %2026 = vmatpush1.msra.mxu0 0.0
    %2027 = vmatprep.subr.mxu0 0.0
    %2028 = vmatpush1.msra.mxu0 0.0
    %2029 = vmatprep.subr.mxu0 0.0
    %2030 = vmatpush1.msra.mxu0 0.0
    %2031 = vmatprep.subr.mxu0 0.0
    %2032 = vmatpush1.msra.mxu0 0.0
    %2033 = vmatprep.subr.mxu0 0.0
    %2034 = vmatpush1.msra.mxu0 0.0
    %2035 = vmatprep.subr.mxu0 0.0
    %2036 = vmatpush1.msra.mxu0 0.0
    %2037 = vmatprep.subr.mxu0 0.0
    %2038 = vmatpush1.msra.mxu0 0.0
    %2039 = vmatprep.subr.mxu0 0.0
    %2040 = vmatpush1.msra.mxu0 0.0
    %2041 = vmatprep.subr.mxu0 0.0
    %2042 = vmatpush1.msra.mxu0 0.0
    %2043 = vmatprep.subr.mxu0 0.0
    %2044 = vmatpush1.msra.mxu0 0.0
    %2045 = vmatprep.mubr.f32.mxu0 0.0
    %2046 = vmatmul.mubr.f32.gmra.mrb[0].mxu0 %v1979
    %v2047 = vpop.f32.mrb[0].mxu0
    %v2048 = vadd.f32 %v1977, %v2047
    %v2049 = vpop.f32.mrb[0].mxu0
    %2050 = vdwg.mxu0
    %v2051 = vmax.f32 %v2048, 0.0
    %v2052 = vld [vmem:[%s7] sm:$0xff]
    %v2053 = vld [vmem:[%s7 + $0x8] sm:$0xff]
    %v2054 = vld [vmem:[%s7 + $0x10] sm:$0xff]
    %v2055 = vld [vmem:[%s7 + $0x18] sm:$0xff]
    %v2056 = vld [vmem:[%s7 + $0x20] sm:$0xff]
    %v2058 = vsel %vm1897, %v2051, 0
    %2060 = vmatprep.subr.mxu0 0.0
    %2061 = vmatpush1.msra.mxu0 %v2056
    %2062 = vmatprep.subr.mxu0 0.0
    %2063 = vmatpush1.msra.mxu0 0.0
    %2064 = vmatprep.subr.mxu0 0.0
    %2065 = vmatpush1.msra.mxu0 0.0
    %2066 = vmatprep.subr.mxu0 0.0
    %2067 = vmatpush1.msra.mxu0 0.0
    %2068 = vmatprep.subr.mxu0 0.0
    %2069 = vmatpush1.msra.mxu0 0.0
    %2070 = vmatprep.subr.mxu0 0.0
    %2071 = vmatpush1.msra.mxu0 0.0
    %2072 = vmatprep.subr.mxu0 0.0
    %2073 = vmatpush1.msra.mxu0 0.0
    %2074 = vmatprep.subr.mxu0 0.0
    %2075 = vmatpush1.msra.mxu0 0.0
    %2076 = vmatprep.subr.mxu0 0.0
    %2077 = vmatpush1.msra.mxu0 0.0
    %2078 = vmatprep.subr.mxu0 0.0
    %2079 = vmatpush1.msra.mxu0 0.0
    %2080 = vmatprep.subr.mxu0 0.0
    %2081 = vmatpush1.msra.mxu0 0.0
    %2082 = vmatprep.subr.mxu0 0.0
    %2083 = vmatpush1.msra.mxu0 0.0
    %2084 = vmatprep.subr.mxu0 0.0
    %2085 = vmatpush1.msra.mxu0 0.0
    %2086 = vmatprep.subr.mxu0 0.0
    %2087 = vmatpush1.msra.mxu0 0.0
    %2088 = vmatprep.subr.mxu0 0.0
    %2089 = vmatpush1.msra.mxu0 0.0
    %2090 = vmatprep.subr.mxu0 0.0
    %2091 = vmatpush1.msra.mxu0 0.0
    %2092 = vmatprep.subr.mxu0 0.0
    %2093 = vmatpush1.msra.mxu0 0.0
    %2094 = vmatprep.subr.mxu0 0.0
    %2095 = vmatpush1.msra.mxu0 0.0
    %2096 = vmatprep.subr.mxu0 0.0
    %2097 = vmatpush1.msra.mxu0 0.0
    %2098 = vmatprep.subr.mxu0 0.0
    %2099 = vmatpush1.msra.mxu0 0.0
    %2100 = vmatprep.subr.mxu0 0.0
    %2101 = vmatpush1.msra.mxu0 0.0
    %2102 = vmatprep.subr.mxu0 0.0
    %2103 = vmatpush1.msra.mxu0 0.0
    %2104 = vmatprep.subr.mxu0 0.0
    %2105 = vmatpush1.msra.mxu0 0.0
    %2106 = vmatprep.subr.mxu0 0.0
    %2107 = vmatpush1.msra.mxu0 0.0
    %2108 = vmatprep.subr.mxu0 0.0
    %2109 = vmatpush1.msra.mxu0 0.0
    %2110 = vmatprep.subr.mxu0 0.0
    %2111 = vmatpush1.msra.mxu0 0.0
    %2112 = vmatprep.subr.mxu0 0.0
    %2113 = vmatpush1.msra.mxu0 0.0
    %2114 = vmatprep.subr.mxu0 0.0
    %2115 = vmatpush1.msra.mxu0 0.0
    %2116 = vmatprep.subr.mxu0 0.0
    %2117 = vmatpush1.msra.mxu0 0.0
    %2118 = vmatprep.subr.mxu0 0.0
    %2119 = vmatpush1.msra.mxu0 0.0
    %2120 = vmatprep.subr.mxu0 0.0
    %2121 = vmatpush1.msra.mxu0 0.0
    %2122 = vmatprep.subr.mxu0 0.0
    %2123 = vmatpush1.msra.mxu0 0.0
    %2124 = vmatprep.mubr.f32.mxu0 0.0
    %2125 = vmatmul.mubr.f32.gmra.mrb[0].mxu0 %v2058
    %v2126 = vpop.f32.mrb[0].mxu0
    %v2127 = vadd.f32 0.0, %v2126
    %v2128 = vpop.f32.mrb[0].mxu0
    %2129 = vdwg.mxu0
    %2131 = vrot.lane.b32.xlu0 %v1889, 32
    %v2132 = vpop.permute.xlu0 %2131
    %v2133 = vsel %vm163, %v2132, 0
    %2135 = vmatprep.subr.mxu0 0.0
    %2136 = vmatpush1.msra.mxu0 %v2052
    %2137 = vmatprep.subr.mxu0 0.0
    %2138 = vmatpush1.msra.mxu0 %v2053
    %2139 = vmatprep.subr.mxu0 0.0
    %2140 = vmatpush1.msra.mxu0 %v2054
    %2141 = vmatprep.subr.mxu0 0.0
    %2142 = vmatpush1.msra.mxu0 %v2055
    %2143 = vmatprep.subr.mxu0 0.0
    %2144 = vmatpush1.msra.mxu0 0.0
    %2145 = vmatprep.subr.mxu0 0.0
    %2146 = vmatpush1.msra.mxu0 0.0
    %2147 = vmatprep.subr.mxu0 0.0
    %2148 = vmatpush1.msra.mxu0 0.0
    %2149 = vmatprep.subr.mxu0 0.0
    %2150 = vmatpush1.msra.mxu0 0.0
    %2151 = vmatprep.subr.mxu0 0.0
    %2152 = vmatpush1.msra.mxu0 0.0
    %2153 = vmatprep.subr.mxu0 0.0
    %2154 = vmatpush1.msra.mxu0 0.0
    %2155 = vmatprep.subr.mxu0 0.0
    %2156 = vmatpush1.msra.mxu0 0.0
    %2157 = vmatprep.subr.mxu0 0.0
    %2158 = vmatpush1.msra.mxu0 0.0
    %2159 = vmatprep.subr.mxu0 0.0
    %2160 = vmatpush1.msra.mxu0 0.0
    %2161 = vmatprep.subr.mxu0 0.0
    %2162 = vmatpush1.msra.mxu0 0.0
    %2163 = vmatprep.subr.mxu0 0.0
    %2164 = vmatpush1.msra.mxu0 0.0
    %2165 = vmatprep.subr.mxu0 0.0
    %2166 = vmatpush1.msra.mxu0 0.0
    %2167 = vmatprep.subr.mxu0 0.0
    %2168 = vmatpush1.msra.mxu0 0.0
    %2169 = vmatprep.subr.mxu0 0.0
    %2170 = vmatpush1.msra.mxu0 0.0
    %2171 = vmatprep.subr.mxu0 0.0
    %2172 = vmatpush1.msra.mxu0 0.0
    %2173 = vmatprep.subr.mxu0 0.0
    %2174 = vmatpush1.msra.mxu0 0.0
    %2175 = vmatprep.subr.mxu0 0.0
    %2176 = vmatpush1.msra.mxu0 0.0
    %2177 = vmatprep.subr.mxu0 0.0
    %2178 = vmatpush1.msra.mxu0 0.0
    %2179 = vmatprep.subr.mxu0 0.0
    %2180 = vmatpush1.msra.mxu0 0.0
    %2181 = vmatprep.subr.mxu0 0.0
    %2182 = vmatpush1.msra.mxu0 0.0
    %2183 = vmatprep.subr.mxu0 0.0
    %2184 = vmatpush1.msra.mxu0 0.0
    %2185 = vmatprep.subr.mxu0 0.0
    %2186 = vmatpush1.msra.mxu0 0.0
    %2187 = vmatprep.subr.mxu0 0.0
    %2188 = vmatpush1.msra.mxu0 0.0
    %2189 = vmatprep.subr.mxu0 0.0
    %2190 = vmatpush1.msra.mxu0 0.0
    %2191 = vmatprep.subr.mxu0 0.0
    %2192 = vmatpush1.msra.mxu0 0.0
    %2193 = vmatprep.subr.mxu0 0.0
    %2194 = vmatpush1.msra.mxu0 0.0
    %2195 = vmatprep.subr.mxu0 0.0
    %2196 = vmatpush1.msra.mxu0 0.0
    %2197 = vmatprep.subr.mxu0 0.0
    %2198 = vmatpush1.msra.mxu0 0.0
    %2199 = vmatprep.mubr.f32.mxu0 0.0
    %2200 = vmatmul.mubr.f32.gmra.mrb[0].mxu0 %v2133
    %v2201 = vpop.f32.mrb[0].mxu0
    %v2202 = vadd.f32 %v2127, %v2201
    %v2203 = vpop.f32.mrb[0].mxu0
    %2204 = vdwg.mxu0
    %v2205 = vld [vmem:[%s8] sm:$0x1]
    %v2207 = vlaneseq
    %v2208 = vshrl.u32 %v2207, 7
    %v2209 = vsub.s32 0, %v2208
    %v2210 = vrot.slane %v2205, %v2209
    %v2212 = vadd.f32 %v2202, %v2210
    %v2213 = vmax.f32 %v2212, 0.0
    %v2214 = vld [vmem:[%s9] sm:$0xff]
    %v2215 = vld [vmem:[%s9 + $0x8] sm:$0xff]
    %v2216 = vld [vmem:[%s9 + $0x10] sm:$0xff]
    %v2217 = vld [vmem:[%s9 + $0x18] sm:$0xff]
    %v2218 = vld [vmem:[%s10] sm:$0x1]
    %v2220 = vlaneseq
    %v2221 = vshrl.u32 %v2220, 7
    %v2222 = vsub.s32 0, %v2221
    %v2223 = vrot.slane %v2218, %v2222
    %v2226 = vsel %vm163, %v2213, 0
    %2228 = vmatprep.subr.mxu0 0.0
    %2229 = vmatpush1.msra.mxu0 %v2214
    %2230 = vmatprep.subr.mxu0 0.0
    %2231 = vmatpush1.msra.mxu0 %v2215
    %2232 = vmatprep.subr.mxu0 0.0
    %2233 = vmatpush1.msra.mxu0 %v2216
    %2234 = vmatprep.subr.mxu0 0.0
    %2235 = vmatpush1.msra.mxu0 %v2217
    %2236 = vmatprep.subr.mxu0 0.0
    %2237 = vmatpush1.msra.mxu0 0.0
    %2238 = vmatprep.subr.mxu0 0.0
    %2239 = vmatpush1.msra.mxu0 0.0
    %2240 = vmatprep.subr.mxu0 0.0
    %2241 = vmatpush1.msra.mxu0 0.0
    %2242 = vmatprep.subr.mxu0 0.0
    %2243 = vmatpush1.msra.mxu0 0.0
    %2244 = vmatprep.subr.mxu0 0.0
    %2245 = vmatpush1.msra.mxu0 0.0
    %2246 = vmatprep.subr.mxu0 0.0
    %2247 = vmatpush1.msra.mxu0 0.0
    %2248 = vmatprep.subr.mxu0 0.0
    %2249 = vmatpush1.msra.mxu0 0.0
    %2250 = vmatprep.subr.mxu0 0.0
    %2251 = vmatpush1.msra.mxu0 0.0
    %2252 = vmatprep.subr.mxu0 0.0
    %2253 = vmatpush1.msra.mxu0 0.0
    %2254 = vmatprep.subr.mxu0 0.0
    %2255 = vmatpush1.msra.mxu0 0.0
    %2256 = vmatprep.subr.mxu0 0.0
    %2257 = vmatpush1.msra.mxu0 0.0
    %2258 = vmatprep.subr.mxu0 0.0
    %2259 = vmatpush1.msra.mxu0 0.0
    %2260 = vmatprep.subr.mxu0 0.0
    %2261 = vmatpush1.msra.mxu0 0.0
    %2262 = vmatprep.subr.mxu0 0.0
    %2263 = vmatpush1.msra.mxu0 0.0
    %2264 = vmatprep.subr.mxu0 0.0
    %2265 = vmatpush1.msra.mxu0 0.0
    %2266 = vmatprep.subr.mxu0 0.0
    %2267 = vmatpush1.msra.mxu0 0.0
    %2268 = vmatprep.subr.mxu0 0.0
    %2269 = vmatpush1.msra.mxu0 0.0
    %2270 = vmatprep.subr.mxu0 0.0
    %2271 = vmatpush1.msra.mxu0 0.0
    %2272 = vmatprep.subr.mxu0 0.0
    %2273 = vmatpush1.msra.mxu0 0.0
    %2274 = vmatprep.subr.mxu0 0.0
    %2275 = vmatpush1.msra.mxu0 0.0
    %2276 = vmatprep.subr.mxu0 0.0
    %2277 = vmatpush1.msra.mxu0 0.0
    %2278 = vmatprep.subr.mxu0 0.0
    %2279 = vmatpush1.msra.mxu0 0.0
    %2280 = vmatprep.subr.mxu0 0.0
    %2281 = vmatpush1.msra.mxu0 0.0
    %2282 = vmatprep.subr.mxu0 0.0
    %2283 = vmatpush1.msra.mxu0 0.0
    %2284 = vmatprep.subr.mxu0 0.0
    %2285 = vmatpush1.msra.mxu0 0.0
    %2286 = vmatprep.subr.mxu0 0.0
    %2287 = vmatpush1.msra.mxu0 0.0
    %2288 = vmatprep.subr.mxu0 0.0
    %2289 = vmatpush1.msra.mxu0 0.0
    %2290 = vmatprep.subr.mxu0 0.0
    %2291 = vmatpush1.msra.mxu0 0.0
    %2292 = vmatprep.mubr.f32.mxu0 0.0
    %2293 = vmatmul.mubr.f32.gmra.mrb[0].mxu0 %v2226
    %v2294 = vpop.f32.mrb[0].mxu0
    %v2295 = vadd.f32 %v2223, %v2294
    %v2296 = vpop.f32.mrb[0].mxu0
    %2297 = vdwg.mxu0
    %v2298 = vlaneseq
    %v2299 = vand.u32 %v2298, 127
    %vm2300 = vcmp.lt.s32.totalorder %v2299, 10
    %v2301 = vsel %vm2300, %v2295, -inf
    %vm2302 = vcmask 82944
    %v2303 = vsel %vm2302, %v2301, -inf
    %2304 = vmax.xlane.f32.xlu0 %v2303
    %v2305 = vpop.xlane.xlu0 %2304
    %v2306 = vsub.f32 %v2295, %v2305
    %v2307 = vmul.f32 %v2306, 1.442695
    %v2308 = vpow.pop %v2307
    %v2309 = vsel %vm2300, %v2308, 0.0
    %v2310 = vsel %vm2302, %v2309, 0.0
    %2311 = vadd.xlane.f32.xlu0 %v2310
    %v2312 = vpop.xlane.xlu0 %2311
    %v2313 = vrcp.pop %v2312
    %v2314 = vmul.f32 %v2309, %v2313
    %v2315 = vsel %vm2300, %v2314, %v2295
    %2316 = vst.msk [vmem:[#allocation9] sm:$0x3] %vm2302, %v2315
    // Predicated region
    $region54: #{tpu_custom_call.1} parent=1 // pred_check
      _
    $region55: #{tpu_custom_call.1} parent=1 // pred_check_branch
      %2318 = sbr.rel (0) target = $region57
    $region56: #{tpu_custom_call.1} parent=1 // pred_region
      %s2320 = ssub.s32 32, 32
      %2321 = vsyncadd [#allocation6], %s2320
      %s2323 = sshll.u32 [#allocation9], 4
      %s2324 = int_to_ptr.vmem [resolvable:$true] %s2323
      %2326 = dma.vmem_to_hbm [thread:$0]  %s2324, 32, %s11, [#allocation6]
    $region57: #{tpu_custom_call.1} parent=1 // pred_fallthru
      _
    // Predicated region
    $region58: #{tpu_custom_call.1} parent=1 // pred_check
      _
    $region59: #{tpu_custom_call.1} parent=1 // pred_check_branch
      %2328 = sbr.rel (0) target = $region61
    $region60: #{tpu_custom_call.1} parent=1 // pred_region
      %2329 = dma.done [#allocation6], 32
    $region61: #{tpu_custom_call.1} parent=1 // pred_fallthru
      _
    %2330 = vsyncpa [#allocation5], 1
    %2331 = vsyncpa [#allocation8], 1
    %2332 = vsyncpa [#allocation6], 1

</llo_original>
